<compile_context>
chip_gen: v7x
topology: tpu7x:2x2x1
jax: 0.10.0
libtpu: 0.0.40
codegen_flags: <defaults>
</compile_context>

<pallas_src>
import functools

import numpy as np
import jax
import jax.numpy as jnp
from jax.experimental import pallas as pl
from jax.experimental.pallas import tpu as pltpu

KS = 11                 # Gaussian kernel size
PAD = KS // 2           # 5
SIGMA = 1.0
LANE = 128              # vreg lane width
LPAD = 8                # sublane-aligned halo for the staged horizontal pass
ROLL_MIN_W = 64         # use the XLU-roll horizontal pass at/above this width


def _gaussian_2d_np(ks=KS, sigma=SIGMA):
    """Exactly the PyTorch module's weight (used by the reference conv)."""
    x = np.array([i - ks // 2 for i in range(ks)], dtype=np.float32)
    Ix, Iy = np.meshgrid(x, x)
    k = 1.0 / (2.0 * np.pi * sigma) * np.exp(-(Ix ** 2 + Iy ** 2) / (2.0 * sigma ** 2))
    return (k / np.sum(k)).astype(np.float32)


def _gaussian_1d_np(ks=KS, sigma=SIGMA):
    """1D factor: the normalized 2D kernel equals outer(g1, g1)."""
    x = np.arange(ks, dtype=np.float64) - ks // 2
    g = np.exp(-(x ** 2) / (2.0 * sigma ** 2))
    return g / np.sum(g)


_GAUSS_2D = _gaussian_2d_np()
_G1D = [float(v) for v in _gaussian_1d_np()]   # symmetric: _G1D[d] == _G1D[10-d]


def _phys_vmem_bytes():
    try:
        return int(getattr(pltpu.get_tpu_info(), "vmem_capacity_bytes", 64 << 20))
    except Exception:
        return 64 << 20     # conservative fallback (v7x per-core VMEM)


def _choose_tile_rows(H, W, L, phys_vmem, requested, single_slab):
    """Pick the H-tile height TH (multiple of 8 when tiling) and tile count."""
    bytes_per_row = W * L * 4
    # ~12 live row-sized buffers: double-buffered input + output blocks, halo
    # blocks, the staging scratch and headroom for spilled pass values.
    budget = max(phys_vmem // 2, 16 << 20)
    rows_fit = max(8, int(budget // (12 * bytes_per_row)) // 8 * 8)
    cap = 128 if phys_vmem <= (64 << 20) else 256
    if requested is not None:
        cap = max(8, (int(requested) // 8) * 8)
    th = int(min(cap, rows_fit))
    if H <= th:
        if single_slab and requested is None and H >= 128:
            # Split anyway so both TensorCores (megacore) get work when there
            # is only one channel slab.
            th = (((H + 1) // 2) + 7) // 8 * 8
        else:
            return H, 1
    if th >= H:
        return H, 1
    return th, -(-H // th)


def _make_kernel(TH, W, L, n_h, use_roll):
    """Kernel body for one (TH, W, L) tile (channels on lanes, weights baked in)."""
    g = _G1D
    Wp = W + 2 * LPAD

    def fold(tap):
        # Symmetric 11-tap FIR: 5 mirrored pairs + centre -> 6 multiplies,
        # split over two partial sums to break the serial add chain.
        c = g[5] * tap(5)
        a = g[0] * (tap(0) + tap(10)) + g[2] * (tap(2) + tap(8))
        b = g[1] * (tap(1) + tap(9)) + g[3] * (tap(3) + tap(7))
        a = a + g[4] * (tap(4) + tap(6))
        return (a + b) + c

    def vertical(xp):
        # xp: (TH + 2*PAD, W, L) f32 value.  Slices along the leading
        # (non-tiled) axis are register bookkeeping, not copies.
        return fold(lambda d: xp[d:d + TH])

    def horizontal_roll(v):
        # W >= ROLL_MIN_W: shift on the (otherwise idle) XLU, no VMEM staging.
        z = jnp.zeros((TH, LPAD, L), jnp.float32)
        vp = jnp.concatenate([z, v, z], axis=1)          # v at cols [LPAD, LPAD+W)

        def tap(d):
            if d == PAD:
                return v                                  # centre tap: no shift
            return pltpu.roll(vp, shift=Wp - (LPAD - PAD + d), axis=1)[:, 0:W, :]

        return fold(tap)

    def horizontal_staged(v, tmp_ref):
        # Small W: aligned staging store + sublane-offset reloads.
        # Halos are re-zeroed every step on purpose: once-only zeroing
        # (pl.program_id(...) == 0) is unsafe with 'parallel' grid axes, since
        # each megacore TensorCore owns its own scratch instance.
        z = jnp.zeros((TH, LPAD, L), jnp.float32)
        tmp_ref[:, 0:LPAD, :] = z
        tmp_ref[:, LPAD + W:LPAD + W + LPAD, :] = z
        tmp_ref[:, LPAD:LPAD + W, :] = v                  # 8-aligned store
        base = LPAD - PAD                                 # = 3
        return fold(lambda d: tmp_ref[:, base + d:base + d + W, :])

    def finish(v, o_ref, scratch):
        if use_roll:
            o_ref[...] = horizontal_roll(v).astype(o_ref.dtype)
        else:
            o_ref[...] = horizontal_staged(v, scratch[0]).astype(o_ref.dtype)

    if n_h == 1:
        def kernel(x_ref, o_ref, *scratch):
            zrow = jnp.zeros((PAD, W, L), jnp.float32)
            xp = jnp.concatenate(
                [zrow, x_ref[...].astype(jnp.float32), zrow], axis=0)
            finish(vertical(xp), o_ref, scratch)
    else:
        def kernel(x_ref, top_ref, bot_ref, o_ref, *scratch):
            j = pl.program_id(1)
            # Halo rows from the neighbouring H-tiles; zeroed at the image
            # borders (the clamped halo blocks' content is unused there).
            top = (top_ref[8 - PAD:8, :, :].astype(jnp.float32)
                   * (j > 0).astype(jnp.float32))
            bot = (bot_ref[0:PAD, :, :].astype(jnp.float32)
                   * (j < n_h - 1).astype(jnp.float32))
            xp = jnp.concatenate(
                [top, x_ref[...].astype(jnp.float32), bot], axis=0)
            finish(vertical(xp), o_ref, scratch)

    return kernel


@functools.partial(jax.jit, static_argnames=("tile_rows",))
def gauss_filter(x, tile_rows=None):
    """x: (N, C, H, W) -> (N, C, H, W); 11x11 Gaussian blur per channel."""
    N, C, H, W = x.shape
    NC = N * C

    # Channels-last slab layout: channels on the lane dim.
    # TODO(synk): for NC < 128 the lane dim is under-occupied; a (W, NC)-folded
    # or W-on-lanes layout would restore lane density for small channel counts.
    if NC >= LANE:
        L = LANE
        NC_pad = -(-NC // LANE) * LANE
    else:
        L, NC_pad = NC, NC
    n_slabs = NC_pad // L

    phys = _phys_vmem_bytes()
    TH, n_h = _choose_tile_rows(H, W, L, phys, tile_rows, n_slabs == 1)
    Hpad = TH * n_h
    use_roll = W >= ROLL_MIN_W

    # TODO(synk): the NCHW -> (H, W, NC) relayout (and its inverse) are full
    # HBM read+write passes done by XLA outside the kernel; fusing them into
    # the kernel with in-kernel (XLU) transposes would roughly halve
    # end-to-end HBM traffic.
    x_cl = jnp.transpose(x.reshape(NC, H, W), (1, 2, 0))
    if NC_pad != NC:
        x_cl = jnp.pad(x_cl, ((0, 0), (0, 0), (0, NC_pad - NC)))
    if Hpad != H:
        # Extra zero rows at the bottom behave exactly like the conv's own
        # zero padding, so the cropped result is unchanged.
        x_cl = jnp.pad(x_cl, ((0, Hpad - H), (0, 0), (0, 0)))

    kernel = _make_kernel(TH, W, L, n_h, use_roll)

    # VMEM budget from the real footprint, clamped to physical VMEM.
    blk = TH * W * L * 4
    halo = (8 * W * L * 4) if n_h > 1 else 0
    scratch_bytes = 0 if use_roll else TH * (W + 2 * LPAD) * L * 4
    est = 4 * blk + 4 * halo + scratch_bytes + 8 * blk + (2 << 20)
    vmem_limit = int(min(phys - (2 << 20), max(est, 32 << 20)))

    if n_h == 1:
        grid = (n_slabs,)
        in_specs = [pl.BlockSpec((TH, W, L), lambda i: (0, 0, i))]
        out_specs = pl.BlockSpec((TH, W, L), lambda i: (0, 0, i))
        operands = (x_cl,)
        semantics = ("parallel",)
    else:
        hb = TH // 8                   # halo blocks are 8 rows tall
        nhb = Hpad // 8
        grid = (n_slabs, n_h)
        in_specs = [
            pl.BlockSpec((TH, W, L), lambda i, j: (j, 0, i)),
            pl.BlockSpec((8, W, L),
                         lambda i, j: (jnp.maximum(j * hb - 1, 0), 0, i)),
            pl.BlockSpec((8, W, L),
                         lambda i, j: (jnp.minimum((j + 1) * hb, nhb - 1), 0, i)),
        ]
        out_specs = pl.BlockSpec((TH, W, L), lambda i, j: (j, 0, i))
        operands = (x_cl, x_cl, x_cl)
        semantics = ("parallel", "parallel")

    scratch_shapes = ([] if use_roll
                      else [pltpu.VMEM((TH, W + 2 * LPAD, L), jnp.float32)])

    out_cl = pl.pallas_call(
        kernel,
        out_shape=jax.ShapeDtypeStruct((Hpad, W, NC_pad), x.dtype),
        grid_spec=pltpu.PrefetchScalarGridSpec(
            num_scalar_prefetch=0,
            grid=grid,
            in_specs=in_specs,
            out_specs=out_specs,
            scratch_shapes=scratch_shapes,
        ),
        compiler_params=pltpu.CompilerParams(
            dimension_semantics=semantics,
            vmem_limit_bytes=vmem_limit,
        ),
    )(*operands)

    # TODO(synk): for very wide images (W*L*4 approaching VMEM) the per-tile
    # passes should additionally be register-blocked into 8-row strips (or W
    # tiled) to avoid Mosaic spilling pass values to internal scratch.
    return jnp.transpose(out_cl[:H, :, :NC], (2, 0, 1)).reshape(N, C, H, W)


def gauss_filter_ref(x):
    """Pure-JAX reference (lax conv) matching the PyTorch module exactly."""
    N, C, H, W = x.shape
    w = jnp.asarray(_GAUSS_2D).reshape(1, 1, KS, KS)
    x_flat = x.reshape(N * C, 1, H, W)
    out = jax.lax.conv_general_dilated(
        x_flat, w, window_strides=(1, 1), padding=((PAD, PAD), (PAD, PAD)),
        dimension_numbers=("NCHW", "OIHW", "NCHW"),
    )
    return out.reshape(N, C, H, W)


if __name__ == "__main__":
    key = jax.random.PRNGKey(0)
    k1, k2 = jax.random.split(key)

    # Primary check: shapes implied by the module spec.
    N, C, H, W = 2, 4, 16, 16
    x = jax.random.normal(k1, (N, C, H, W), dtype=jnp.float32)
    out = jax.block_until_ready(gauss_filter(x))
    ref = jax.block_until_ready(gauss_filter_ref(x))
    assert out.shape == (N, C, H, W)
    np.testing.assert_allclose(np.asarray(out), np.asarray(ref),
                               rtol=1e-5, atol=1e-5)

    # Secondary check: exercises the H-tiled path (halo blocks, 2D grid).
    x2 = jax.random.normal(k2, (2, 4, 40, 24), dtype=jnp.float32)
    out2 = jax.block_until_ready(gauss_filter(x2, tile_rows=16))
    ref2 = jax.block_until_ready(gauss_filter_ref(x2))
    np.testing.assert_allclose(np.asarray(out2), np.asarray(ref2),
                               rtol=1e-5, atol=1e-5)

    print("KERNEL_OK")
</pallas_src>

<mosaic_0001>
module attributes {stable_mosaic.version = 11 : i64} {
  func.func @kernel(%arg0: i32, %arg1: memref<16x16x8xf32, #tpu.memory_space<vmem>>, %arg2: memref<16x16x8xf32, #tpu.memory_space<vmem>>, %arg3: memref<16x32x8xf32, #tpu.memory_space<vmem>>) attributes {dimension_semantics = [#tpu.dimension_semantics<parallel>], iteration_bounds = array<i64: 1>, scalar_prefetch = 0 : i64, scratch_operands = 1 : i64, tpu.core_type = #tpu.core_type<tc>, window_params = [{transform_indices = @transform_0, window_bounds = array<i64: 16, 16, 8>}, {transform_indices = @transform_1, window_bounds = array<i64: 16, 16, 8>}]} {
    %cst = arith.constant 0.000000e+00 : f32
    %0 = vector.broadcast %cst : f32 to vector<5x16x8xf32>
    %c0 = arith.constant 0 : index
    %c0_0 = arith.constant 0 : index
    %c0_1 = arith.constant 0 : index
    %1 = vector.load %arg1[%c0, %c0_0, %c0_1] : memref<16x16x8xf32, #tpu.memory_space<vmem>>, vector<16x16x8xf32>
    %2 = tpu.concatenate %0, %1, %0 in 0 : vector<5x16x8xf32>, vector<16x16x8xf32>, vector<5x16x8xf32> -> vector<26x16x8xf32>
    %3 = vector.extract_strided_slice %2 {offsets = [5, 0, 0], sizes = [16, 16, 8], strides = [1, 1, 1]} : vector<26x16x8xf32> to vector<16x16x8xf32>
    %cst_2 = arith.constant 0.398942292 : f32
    %4 = vector.broadcast %cst_2 : f32 to vector<16x16x8xf32>
    %5 = arith.mulf %4, %3 : vector<16x16x8xf32>
    %6 = vector.extract_strided_slice %2 {offsets = [0, 0, 0], sizes = [16, 16, 8], strides = [1, 1, 1]} : vector<26x16x8xf32> to vector<16x16x8xf32>
    %7 = vector.extract_strided_slice %2 {offsets = [10, 0, 0], sizes = [16, 16, 8], strides = [1, 1, 1]} : vector<26x16x8xf32> to vector<16x16x8xf32>
    %8 = arith.addf %6, %7 : vector<16x16x8xf32>
    %cst_3 = arith.constant 1.4867195E-6 : f32
    %9 = vector.broadcast %cst_3 : f32 to vector<16x16x8xf32>
    %10 = arith.mulf %9, %8 : vector<16x16x8xf32>
    %11 = vector.extract_strided_slice %2 {offsets = [2, 0, 0], sizes = [16, 16, 8], strides = [1, 1, 1]} : vector<26x16x8xf32> to vector<16x16x8xf32>
    %12 = vector.extract_strided_slice %2 {offsets = [8, 0, 0], sizes = [16, 16, 8], strides = [1, 1, 1]} : vector<26x16x8xf32> to vector<16x16x8xf32>
    %13 = arith.addf %11, %12 : vector<16x16x8xf32>
    %cst_4 = arith.constant 0.00443184841 : f32
    %14 = vector.broadcast %cst_4 : f32 to vector<16x16x8xf32>
    %15 = arith.mulf %14, %13 : vector<16x16x8xf32>
    %16 = arith.addf %10, %15 : vector<16x16x8xf32>
    %17 = vector.extract_strided_slice %2 {offsets = [1, 0, 0], sizes = [16, 16, 8], strides = [1, 1, 1]} : vector<26x16x8xf32> to vector<16x16x8xf32>
    %18 = vector.extract_strided_slice %2 {offsets = [9, 0, 0], sizes = [16, 16, 8], strides = [1, 1, 1]} : vector<26x16x8xf32> to vector<16x16x8xf32>
    %19 = arith.addf %17, %18 : vector<16x16x8xf32>
    %cst_5 = arith.constant 1.33830225E-4 : f32
    %20 = vector.broadcast %cst_5 : f32 to vector<16x16x8xf32>
    %21 = arith.mulf %20, %19 : vector<16x16x8xf32>
    %22 = vector.extract_strided_slice %2 {offsets = [3, 0, 0], sizes = [16, 16, 8], strides = [1, 1, 1]} : vector<26x16x8xf32> to vector<16x16x8xf32>
    %23 = vector.extract_strided_slice %2 {offsets = [7, 0, 0], sizes = [16, 16, 8], strides = [1, 1, 1]} : vector<26x16x8xf32> to vector<16x16x8xf32>
    %24 = arith.addf %22, %23 : vector<16x16x8xf32>
    %cst_6 = arith.constant 0.0539909676 : f32
    %25 = vector.broadcast %cst_6 : f32 to vector<16x16x8xf32>
    %26 = arith.mulf %25, %24 : vector<16x16x8xf32>
    %27 = arith.addf %21, %26 : vector<16x16x8xf32>
    %28 = vector.extract_strided_slice %2 {offsets = [4, 0, 0], sizes = [16, 16, 8], strides = [1, 1, 1]} : vector<26x16x8xf32> to vector<16x16x8xf32>
    %29 = vector.extract_strided_slice %2 {offsets = [6, 0, 0], sizes = [16, 16, 8], strides = [1, 1, 1]} : vector<26x16x8xf32> to vector<16x16x8xf32>
    %30 = arith.addf %28, %29 : vector<16x16x8xf32>
    %cst_7 = arith.constant 0.241970733 : f32
    %31 = vector.broadcast %cst_7 : f32 to vector<16x16x8xf32>
    %32 = arith.mulf %31, %30 : vector<16x16x8xf32>
    %33 = arith.addf %16, %32 : vector<16x16x8xf32>
    %34 = arith.addf %33, %27 : vector<16x16x8xf32>
    %35 = arith.addf %34, %5 : vector<16x16x8xf32>
    %cst_8 = arith.constant 0.000000e+00 : f32
    %36 = vector.broadcast %cst_8 : f32 to vector<16x8x8xf32>
    %c0_9 = arith.constant 0 : index
    %c0_10 = arith.constant 0 : index
    %c0_11 = arith.constant 0 : index
    %37 = vector.load %arg3[%c0_9, %c0_10, %c0_11] : memref<16x32x8xf32, #tpu.memory_space<vmem>>, vector<16x8x8xf32>
    tpu.vector_store %arg3[%c0_9, %c0_10, %c0_11], %36 {strides = array<i32>} : memref<16x32x8xf32, #tpu.memory_space<vmem>>, vector<16x8x8xf32>,
    %c0_12 = arith.constant 0 : index
    %c24 = arith.constant 24 : index
    %c0_13 = arith.constant 0 : index
    %38 = vector.load %arg3[%c0_12, %c24, %c0_13] : memref<16x32x8xf32, #tpu.memory_space<vmem>>, vector<16x8x8xf32>
    tpu.vector_store %arg3[%c0_12, %c24, %c0_13], %36 {strides = array<i32>} : memref<16x32x8xf32, #tpu.memory_space<vmem>>, vector<16x8x8xf32>,
    %c0_14 = arith.constant 0 : index
    %c8 = arith.constant 8 : index
    %c0_15 = arith.constant 0 : index
    %39 = vector.load %arg3[%c0_14, %c8, %c0_15] : memref<16x32x8xf32, #tpu.memory_space<vmem>>, vector<16x16x8xf32>
    tpu.vector_store %arg3[%c0_14, %c8, %c0_15], %35 {strides = array<i32>} : memref<16x32x8xf32, #tpu.memory_space<vmem>>, vector<16x16x8xf32>,
    %c0_16 = arith.constant 0 : index
    %c8_17 = arith.constant 8 : index
    %c0_18 = arith.constant 0 : index
    %40 = vector.load %arg3[%c0_16, %c8_17, %c0_18] : memref<16x32x8xf32, #tpu.memory_space<vmem>>, vector<16x16x8xf32>
    %cst_19 = arith.constant 0.398942292 : f32
    %41 = vector.broadcast %cst_19 : f32 to vector<16x16x8xf32>
    %42 = arith.mulf %41, %40 : vector<16x16x8xf32>
    %c0_20 = arith.constant 0 : index
    %c3 = arith.constant 3 : index
    %c0_21 = arith.constant 0 : index
    %43 = vector.load %arg3[%c0_20, %c3, %c0_21] : memref<16x32x8xf32, #tpu.memory_space<vmem>>, vector<16x16x8xf32>
    %c0_22 = arith.constant 0 : index
    %c13 = arith.constant 13 : index
    %c0_23 = arith.constant 0 : index
    %44 = vector.load %arg3[%c0_22, %c13, %c0_23] : memref<16x32x8xf32, #tpu.memory_space<vmem>>, vector<16x16x8xf32>
    %45 = arith.addf %43, %44 : vector<16x16x8xf32>
    %cst_24 = arith.constant 1.4867195E-6 : f32
    %46 = vector.broadcast %cst_24 : f32 to vector<16x16x8xf32>
    %47 = arith.mulf %46, %45 : vector<16x16x8xf32>
    %c0_25 = arith.constant 0 : index
    %c5 = arith.constant 5 : index
    %c0_26 = arith.constant 0 : index
    %48 = vector.load %arg3[%c0_25, %c5, %c0_26] : memref<16x32x8xf32, #tpu.memory_space<vmem>>, vector<16x16x8xf32>
    %c0_27 = arith.constant 0 : index
    %c11 = arith.constant 11 : index
    %c0_28 = arith.constant 0 : index
    %49 = vector.load %arg3[%c0_27, %c11, %c0_28] : memref<16x32x8xf32, #tpu.memory_space<vmem>>, vector<16x16x8xf32>
    %50 = arith.addf %48, %49 : vector<16x16x8xf32>
    %cst_29 = arith.constant 0.00443184841 : f32
    %51 = vector.broadcast %cst_29 : f32 to vector<16x16x8xf32>
    %52 = arith.mulf %51, %50 : vector<16x16x8xf32>
    %53 = arith.addf %47, %52 : vector<16x16x8xf32>
    %c0_30 = arith.constant 0 : index
    %c4 = arith.constant 4 : index
    %c0_31 = arith.constant 0 : index
    %54 = vector.load %arg3[%c0_30, %c4, %c0_31] : memref<16x32x8xf32, #tpu.memory_space<vmem>>, vector<16x16x8xf32>
    %c0_32 = arith.constant 0 : index
    %c12 = arith.constant 12 : index
    %c0_33 = arith.constant 0 : index
    %55 = vector.load %arg3[%c0_32, %c12, %c0_33] : memref<16x32x8xf32, #tpu.memory_space<vmem>>, vector<16x16x8xf32>
    %56 = arith.addf %54, %55 : vector<16x16x8xf32>
    %cst_34 = arith.constant 1.33830225E-4 : f32
    %57 = vector.broadcast %cst_34 : f32 to vector<16x16x8xf32>
    %58 = arith.mulf %57, %56 : vector<16x16x8xf32>
    %c0_35 = arith.constant 0 : index
    %c6 = arith.constant 6 : index
    %c0_36 = arith.constant 0 : index
    %59 = vector.load %arg3[%c0_35, %c6, %c0_36] : memref<16x32x8xf32, #tpu.memory_space<vmem>>, vector<16x16x8xf32>
    %c0_37 = arith.constant 0 : index
    %c10 = arith.constant 10 : index
    %c0_38 = arith.constant 0 : index
    %60 = vector.load %arg3[%c0_37, %c10, %c0_38] : memref<16x32x8xf32, #tpu.memory_space<vmem>>, vector<16x16x8xf32>
    %61 = arith.addf %59, %60 : vector<16x16x8xf32>
    %cst_39 = arith.constant 0.0539909676 : f32
    %62 = vector.broadcast %cst_39 : f32 to vector<16x16x8xf32>
    %63 = arith.mulf %62, %61 : vector<16x16x8xf32>
    %64 = arith.addf %58, %63 : vector<16x16x8xf32>
    %c0_40 = arith.constant 0 : index
    %c7 = arith.constant 7 : index
    %c0_41 = arith.constant 0 : index
    %65 = vector.load %arg3[%c0_40, %c7, %c0_41] : memref<16x32x8xf32, #tpu.memory_space<vmem>>, vector<16x16x8xf32>
    %c0_42 = arith.constant 0 : index
    %c9 = arith.constant 9 : index
    %c0_43 = arith.constant 0 : index
    %66 = vector.load %arg3[%c0_42, %c9, %c0_43] : memref<16x32x8xf32, #tpu.memory_space<vmem>>, vector<16x16x8xf32>
    %67 = arith.addf %65, %66 : vector<16x16x8xf32>
    %cst_44 = arith.constant 0.241970733 : f32
    %68 = vector.broadcast %cst_44 : f32 to vector<16x16x8xf32>
    %69 = arith.mulf %68, %67 : vector<16x16x8xf32>
    %70 = arith.addf %53, %69 : vector<16x16x8xf32>
    %71 = arith.addf %70, %64 : vector<16x16x8xf32>
    %72 = arith.addf %71, %42 : vector<16x16x8xf32>
    %c0_45 = arith.constant 0 : index
    %c0_46 = arith.constant 0 : index
    %c0_47 = arith.constant 0 : index
    %73 = vector.load %arg2[%c0_45, %c0_46, %c0_47] : memref<16x16x8xf32, #tpu.memory_space<vmem>>, vector<16x16x8xf32>
    tpu.vector_store %arg2[%c0_45, %c0_46, %c0_47], %72 {strides = array<i32>} : memref<16x16x8xf32, #tpu.memory_space<vmem>>, vector<16x16x8xf32>,
    return
  }
  func.func @transform_0(%arg0: i32) -> (i32, i32, i32) {
    %c0_i32 = arith.constant 0 : i32
    %c0_i32_0 = arith.constant 0 : i32
    %c0_i32_1 = arith.constant 0 : i32
    return %c0_i32, %c0_i32_0, %arg0 : i32, i32, i32
  }
  func.func @transform_1(%arg0: i32) -> (i32, i32, i32) {
    %c0_i32 = arith.constant 0 : i32
    %c0_i32_0 = arith.constant 0 : i32
    %c0_i32_1 = arith.constant 0 : i32
    return %c0_i32, %c0_i32_0, %arg0 : i32, i32, i32
  }
}

</mosaic_0001>

<llo_original>
// kernel: gauss_filter.1
$region0: #{gauss_filter.1}
  #allocation0 [shape = 'u32[]', space=smem, size = 0x4, offset = 0x4, fixed_abs, tag = 'smem constant byte address 0x4 - core index']
  #allocation1 [shape = 'u32[144,128]{1,0:T(1,128)}', space=vmem, size = 0x12000, scoped, tag = 'internal scratch']
  #allocation2 [shape = 'f32[16,32,8]{2,1,0:T(8,128)}', space=vmem, size = 0x40000, scoped, tag = 'scratch operand']
  %s0 = inlined_call_operand.vmem [shape: f32[16,16,8], index: 0, kind: input, shape index: {}]
  %s1 = inlined_call_operand.vmem [shape: f32[16,16,8], index: 1, kind: output, shape index: {}]
  %s2 = sld [smem:[#allocation0]]
  $region14: #{gauss_filter.1} parent=0
    _
  %s4 = ssub.s32 1, %s2
  %s5 = scalar_select 0, %s4, %s2
  // Predicated region
  $region2: #{gauss_filter.1} parent=0 // pred_check
    _
  $region3: #{gauss_filter.1} parent=0 // pred_check_branch
    %7 = sbr.rel (0) target = $region5
  $region4: #{gauss_filter.1} parent=0 // pred_region
    _
  $region5: #{gauss_filter.1} parent=0 // pred_fallthru
    _
  %v8 = vld [vmem:[%s0] sm:$0xff]
  %v9 = vld [vmem:[%s0 + $0x8] sm:$0xff]
  %v10 = vld [vmem:[%s0 + $0x10] sm:$0xff]
  %v11 = vld [vmem:[%s0 + $0x18] sm:$0xff]
  %v12 = vld [vmem:[%s0 + $0x20] sm:$0xff]
  %v13 = vld [vmem:[%s0 + $0x28] sm:$0xff]
  %v14 = vld [vmem:[%s0 + $0x30] sm:$0xff]
  %v15 = vld [vmem:[%s0 + $0x38] sm:$0xff]
  %v16 = vld [vmem:[%s0 + $0x40] sm:$0xff]
  %v17 = vld [vmem:[%s0 + $0x48] sm:$0xff]
  %v18 = vld [vmem:[%s0 + $0x50] sm:$0xff]
  %v19 = vld [vmem:[%s0 + $0x58] sm:$0xff]
  %v20 = vld [vmem:[%s0 + $0x60] sm:$0xff]
  %v21 = vld [vmem:[%s0 + $0x68] sm:$0xff]
  %v22 = vld [vmem:[%s0 + $0x70] sm:$0xff]
  %v23 = vld [vmem:[%s0 + $0x78] sm:$0xff]
  %v24 = vld [vmem:[%s0 + $0x80] sm:$0xff]
  %v25 = vld [vmem:[%s0 + $0x88] sm:$0xff]
  %v26 = vld [vmem:[%s0 + $0x90] sm:$0xff]
  %v27 = vld [vmem:[%s0 + $0x98] sm:$0xff]
  %v28 = vld [vmem:[%s0 + $0xa0] sm:$0xff]
  %v29 = vld [vmem:[%s0 + $0xa8] sm:$0xff]
  %v30 = vld [vmem:[%s0 + $0xb0] sm:$0xff]
  %v31 = vld [vmem:[%s0 + $0xb8] sm:$0xff]
  %v32 = vld [vmem:[%s0 + $0xc0] sm:$0xff]
  %v33 = vld [vmem:[%s0 + $0xc8] sm:$0xff]
  %v34 = vld [vmem:[%s0 + $0xd0] sm:$0xff]
  %v35 = vld [vmem:[%s0 + $0xd8] sm:$0xff]
  %v36 = vld [vmem:[%s0 + $0xe0] sm:$0xff]
  %v37 = vld [vmem:[%s0 + $0xe8] sm:$0xff]
  %v38 = vld [vmem:[%s0 + $0xf0] sm:$0xff]
  %v39 = vld [vmem:[%s0 + $0xf8] sm:$0xff]
  %v40 = vmul.f32 %v8, 0.3989423
  %v41 = vmul.f32 %v9, 0.3989423
  %v42 = vmul.f32 %v10, 0.3989423
  %v43 = vmul.f32 %v11, 0.3989423
  %v44 = vmul.f32 %v12, 0.3989423
  %v45 = vmul.f32 %v13, 0.3989423
  %v46 = vmul.f32 %v14, 0.3989423
  %v47 = vmul.f32 %v15, 0.3989423
  %v48 = vmul.f32 %v16, 0.3989423
  %v49 = vmul.f32 %v17, 0.3989423
  %v50 = vmul.f32 %v18, 0.3989423
  %v51 = vmul.f32 %v19, 0.3989423
  %v52 = vmul.f32 %v20, 0.3989423
  %v53 = vmul.f32 %v21, 0.3989423
  %v54 = vmul.f32 %v22, 0.3989423
  %v55 = vmul.f32 %v23, 0.3989423
  %v56 = vmul.f32 %v24, 0.3989423
  %v57 = vmul.f32 %v25, 0.3989423
  %v58 = vmul.f32 %v26, 0.3989423
  %v59 = vmul.f32 %v27, 0.3989423
  %v60 = vmul.f32 %v28, 0.3989423
  %v61 = vmul.f32 %v29, 0.3989423
  %v62 = vmul.f32 %v30, 0.3989423
  %v63 = vmul.f32 %v31, 0.3989423
  %v64 = vmul.f32 %v32, 0.3989423
  %v65 = vmul.f32 %v33, 0.3989423
  %v66 = vmul.f32 %v34, 0.3989423
  %v67 = vmul.f32 %v35, 0.3989423
  %v68 = vmul.f32 %v36, 0.3989423
  %v69 = vmul.f32 %v37, 0.3989423
  %v70 = vmul.f32 %v38, 0.3989423
  %v71 = vmul.f32 %v39, 0.3989423
  %v72 = vadd.f32 %v18, 0.0
  %v73 = vadd.f32 %v19, 0.0
  %v74 = vadd.f32 %v20, 0.0
  %v75 = vadd.f32 %v21, 0.0
  %v76 = vadd.f32 %v22, 0.0
  %v77 = vadd.f32 %v23, 0.0
  %v78 = vadd.f32 %v24, 0.0
  %v79 = vadd.f32 %v25, 0.0
  %v80 = vadd.f32 %v26, 0.0
  %v81 = vadd.f32 %v27, 0.0
  %v82 = vadd.f32 %v8, %v28
  %v83 = vadd.f32 %v9, %v29
  %v84 = vadd.f32 %v10, %v30
  %v85 = vadd.f32 %v11, %v31
  %v86 = vadd.f32 %v12, %v32
  %v87 = vadd.f32 %v13, %v33
  %v88 = vadd.f32 %v14, %v34
  %v89 = vadd.f32 %v15, %v35
  %v90 = vadd.f32 %v16, %v36
  %v91 = vadd.f32 %v17, %v37
  %v92 = vadd.f32 %v18, %v38
  %v93 = vadd.f32 %v19, %v39
  %v94 = vadd.f32 %v28, 0.0
  %v95 = vadd.f32 %v29, 0.0
  %v96 = vmul.f32 %v72, 1.4867195e-06
  %v97 = vmul.f32 %v73, 1.4867195e-06
  %v98 = vmul.f32 %v74, 1.4867195e-06
  %v99 = vmul.f32 %v75, 1.4867195e-06
  %v100 = vmul.f32 %v76, 1.4867195e-06
  %v101 = vmul.f32 %v77, 1.4867195e-06
  %v102 = vmul.f32 %v78, 1.4867195e-06
  %v103 = vmul.f32 %v79, 1.4867195e-06
  %v104 = vmul.f32 %v80, 1.4867195e-06
  %v105 = vmul.f32 %v81, 1.4867195e-06
  %v106 = vmul.f32 %v82, 1.4867195e-06
  %v107 = vmul.f32 %v83, 1.4867195e-06
  %v108 = vmul.f32 %v84, 1.4867195e-06
  %v109 = vmul.f32 %v85, 1.4867195e-06
  %v110 = vmul.f32 %v86, 1.4867195e-06
  %v111 = vmul.f32 %v87, 1.4867195e-06
  %v112 = vmul.f32 %v88, 1.4867195e-06
  %v113 = vmul.f32 %v89, 1.4867195e-06
  %v114 = vmul.f32 %v90, 1.4867195e-06
  %v115 = vmul.f32 %v91, 1.4867195e-06
  %v116 = vmul.f32 %v92, 1.4867195e-06
  %v117 = vmul.f32 %v93, 1.4867195e-06
  %v118 = vmul.f32 %v94, 1.4867195e-06
  %v119 = vmul.f32 %v95, 1.4867195e-06
  %v120 = vadd.f32 %v14, 0.0
  %v121 = vadd.f32 %v15, 0.0
  %v122 = vadd.f32 %v16, 0.0
  %v123 = vadd.f32 %v17, 0.0
  %v124 = vadd.f32 %v8, %v20
  %v125 = vadd.f32 %v9, %v21
  %v126 = vadd.f32 %v10, %v22
  %v127 = vadd.f32 %v11, %v23
  %v128 = vadd.f32 %v12, %v24
  %v129 = vadd.f32 %v13, %v25
  %v130 = vadd.f32 %v14, %v26
  %v131 = vadd.f32 %v15, %v27
  %v132 = vadd.f32 %v16, %v28
  %v133 = vadd.f32 %v17, %v29
  %v134 = vadd.f32 %v18, %v30
  %v135 = vadd.f32 %v19, %v31
  %v136 = vadd.f32 %v20, %v32
  %v137 = vadd.f32 %v21, %v33
  %v138 = vadd.f32 %v22, %v34
  %v139 = vadd.f32 %v23, %v35
  %v140 = vadd.f32 %v24, %v36
  %v141 = vadd.f32 %v25, %v37
  %v142 = vadd.f32 %v26, %v38
  %v143 = vadd.f32 %v27, %v39
  %v144 = vadd.f32 %v30, 0.0
  %v145 = vadd.f32 %v31, 0.0
  %v146 = vadd.f32 %v32, 0.0
  %v147 = vadd.f32 %v33, 0.0
  %v148 = vmul.f32 %v120, 0.0044318484
  %v149 = vmul.f32 %v121, 0.0044318484
  %v150 = vmul.f32 %v122, 0.0044318484
  %v151 = vmul.f32 %v123, 0.0044318484
  %v152 = vmul.f32 %v72, 0.0044318484
  %v153 = vmul.f32 %v73, 0.0044318484
  %v154 = vmul.f32 %v124, 0.0044318484
  %v155 = vmul.f32 %v125, 0.0044318484
  %v156 = vmul.f32 %v126, 0.0044318484
  %v157 = vmul.f32 %v127, 0.0044318484
  %v158 = vmul.f32 %v128, 0.0044318484
  %v159 = vmul.f32 %v129, 0.0044318484
  %v160 = vmul.f32 %v130, 0.0044318484
  %v161 = vmul.f32 %v131, 0.0044318484
  %v162 = vmul.f32 %v132, 0.0044318484
  %v163 = vmul.f32 %v133, 0.0044318484
  %v164 = vmul.f32 %v134, 0.0044318484
  %v165 = vmul.f32 %v135, 0.0044318484
  %v166 = vmul.f32 %v136, 0.0044318484
  %v167 = vmul.f32 %v137, 0.0044318484
  %v168 = vmul.f32 %v138, 0.0044318484
  %v169 = vmul.f32 %v139, 0.0044318484
  %v170 = vmul.f32 %v140, 0.0044318484
  %v171 = vmul.f32 %v141, 0.0044318484
  %v172 = vmul.f32 %v142, 0.0044318484
  %v173 = vmul.f32 %v143, 0.0044318484
  %v174 = vmul.f32 %v94, 0.0044318484
  %v175 = vmul.f32 %v95, 0.0044318484
  %v176 = vmul.f32 %v144, 0.0044318484
  %v177 = vmul.f32 %v145, 0.0044318484
  %v178 = vmul.f32 %v146, 0.0044318484
  %v179 = vmul.f32 %v147, 0.0044318484
  %v180 = vadd.f32 %v96, %v148
  %v181 = vadd.f32 %v97, %v149
  %v182 = vadd.f32 %v98, %v150
  %v183 = vadd.f32 %v99, %v151
  %v184 = vadd.f32 %v100, %v152
  %v185 = vadd.f32 %v101, %v153
  %v186 = vadd.f32 %v102, %v154
  %v187 = vadd.f32 %v103, %v155
  %v188 = vadd.f32 %v104, %v156
  %v189 = vadd.f32 %v105, %v157
  %v190 = vadd.f32 %v106, %v158
  %v191 = vadd.f32 %v107, %v159
  %v192 = vadd.f32 %v108, %v160
  %v193 = vadd.f32 %v109, %v161
  %v194 = vadd.f32 %v110, %v162
  %v195 = vadd.f32 %v111, %v163
  %v196 = vadd.f32 %v112, %v164
  %v197 = vadd.f32 %v113, %v165
  %v198 = vadd.f32 %v114, %v166
  %v199 = vadd.f32 %v115, %v167
  %v200 = vadd.f32 %v116, %v168
  %v201 = vadd.f32 %v117, %v169
  %v202 = vadd.f32 %v98, %v170
  %v203 = vadd.f32 %v99, %v171
  %v204 = vadd.f32 %v100, %v172
  %v205 = vadd.f32 %v101, %v173
  %v206 = vadd.f32 %v102, %v174
  %v207 = vadd.f32 %v103, %v175
  %v208 = vadd.f32 %v104, %v176
  %v209 = vadd.f32 %v105, %v177
  %v210 = vadd.f32 %v118, %v178
  %v211 = vadd.f32 %v119, %v179
  %v212 = vadd.f32 %v8, %v24
  %v213 = vadd.f32 %v9, %v25
  %v214 = vadd.f32 %v10, %v26
  %v215 = vadd.f32 %v11, %v27
  %v216 = vadd.f32 %v12, %v28
  %v217 = vadd.f32 %v13, %v29
  %v218 = vadd.f32 %v14, %v30
  %v219 = vadd.f32 %v15, %v31
  %v220 = vadd.f32 %v16, %v32
  %v221 = vadd.f32 %v17, %v33
  %v222 = vadd.f32 %v18, %v34
  %v223 = vadd.f32 %v19, %v35
  %v224 = vadd.f32 %v20, %v36
  %v225 = vadd.f32 %v21, %v37
  %v226 = vadd.f32 %v22, %v38
  %v227 = vadd.f32 %v23, %v39
  %v228 = vmul.f32 %v122, 0.00013383022
  %v229 = vmul.f32 %v123, 0.00013383022
  %v230 = vmul.f32 %v72, 0.00013383022
  %v231 = vmul.f32 %v73, 0.00013383022
  %v232 = vmul.f32 %v74, 0.00013383022
  %v233 = vmul.f32 %v75, 0.00013383022
  %v234 = vmul.f32 %v76, 0.00013383022
  %v235 = vmul.f32 %v77, 0.00013383022
  %v236 = vmul.f32 %v212, 0.00013383022
  %v237 = vmul.f32 %v213, 0.00013383022
  %v238 = vmul.f32 %v214, 0.00013383022
  %v239 = vmul.f32 %v215, 0.00013383022
  %v240 = vmul.f32 %v216, 0.00013383022
  %v241 = vmul.f32 %v217, 0.00013383022
  %v242 = vmul.f32 %v218, 0.00013383022
  %v243 = vmul.f32 %v219, 0.00013383022
  %v244 = vmul.f32 %v220, 0.00013383022
  %v245 = vmul.f32 %v221, 0.00013383022
  %v246 = vmul.f32 %v222, 0.00013383022
  %v247 = vmul.f32 %v223, 0.00013383022
  %v248 = vmul.f32 %v224, 0.00013383022
  %v249 = vmul.f32 %v225, 0.00013383022
  %v250 = vmul.f32 %v226, 0.00013383022
  %v251 = vmul.f32 %v227, 0.00013383022
  %v252 = vmul.f32 %v78, 0.00013383022
  %v253 = vmul.f32 %v79, 0.00013383022
  %v254 = vmul.f32 %v80, 0.00013383022
  %v255 = vmul.f32 %v81, 0.00013383022
  %v256 = vmul.f32 %v94, 0.00013383022
  %v257 = vmul.f32 %v95, 0.00013383022
  %v258 = vmul.f32 %v144, 0.00013383022
  %v259 = vmul.f32 %v145, 0.00013383022
  %v260 = vadd.f32 %v12, 0.0
  %v261 = vadd.f32 %v13, 0.0
  %v262 = vadd.f32 %v8, %v16
  %v263 = vadd.f32 %v9, %v17
  %v264 = vadd.f32 %v10, %v18
  %v265 = vadd.f32 %v11, %v19
  %v266 = vadd.f32 %v12, %v20
  %v267 = vadd.f32 %v13, %v21
  %v268 = vadd.f32 %v14, %v22
  %v269 = vadd.f32 %v15, %v23
  %v270 = vadd.f32 %v16, %v24
  %v271 = vadd.f32 %v17, %v25
  %v272 = vadd.f32 %v18, %v26
  %v273 = vadd.f32 %v19, %v27
  %v274 = vadd.f32 %v20, %v28
  %v275 = vadd.f32 %v21, %v29
  %v276 = vadd.f32 %v22, %v30
  %v277 = vadd.f32 %v23, %v31
  %v278 = vadd.f32 %v24, %v32
  %v279 = vadd.f32 %v25, %v33
  %v280 = vadd.f32 %v26, %v34
  %v281 = vadd.f32 %v27, %v35
  %v282 = vadd.f32 %v28, %v36
  %v283 = vadd.f32 %v29, %v37
  %v284 = vadd.f32 %v30, %v38
  %v285 = vadd.f32 %v31, %v39
  %v286 = vadd.f32 %v34, 0.0
  %v287 = vadd.f32 %v35, 0.0
  %v288 = vmul.f32 %v260, 0.053990968
  %v289 = vmul.f32 %v261, 0.053990968
  %v290 = vmul.f32 %v120, 0.053990968
  %v291 = vmul.f32 %v121, 0.053990968
  %v292 = vmul.f32 %v262, 0.053990968
  %v293 = vmul.f32 %v263, 0.053990968
  %v294 = vmul.f32 %v264, 0.053990968
  %v295 = vmul.f32 %v265, 0.053990968
  %v296 = vmul.f32 %v266, 0.053990968
  %v297 = vmul.f32 %v267, 0.053990968
  %v298 = vmul.f32 %v268, 0.053990968
  %v299 = vmul.f32 %v269, 0.053990968
  %v300 = vmul.f32 %v270, 0.053990968
  %v301 = vmul.f32 %v271, 0.053990968
  %v302 = vmul.f32 %v272, 0.053990968
  %v303 = vmul.f32 %v273, 0.053990968
  %v304 = vmul.f32 %v274, 0.053990968
  %v305 = vmul.f32 %v275, 0.053990968
  %v306 = vmul.f32 %v276, 0.053990968
  %v307 = vmul.f32 %v277, 0.053990968
  %v308 = vmul.f32 %v278, 0.053990968
  %v309 = vmul.f32 %v279, 0.053990968
  %v310 = vmul.f32 %v280, 0.053990968
  %v311 = vmul.f32 %v281, 0.053990968
  %v312 = vmul.f32 %v282, 0.053990968
  %v313 = vmul.f32 %v283, 0.053990968
  %v314 = vmul.f32 %v284, 0.053990968
  %v315 = vmul.f32 %v285, 0.053990968
  %v316 = vmul.f32 %v146, 0.053990968
  %v317 = vmul.f32 %v147, 0.053990968
  %v318 = vmul.f32 %v286, 0.053990968
  %v319 = vmul.f32 %v287, 0.053990968
  %v320 = vadd.f32 %v228, %v288
  %v321 = vadd.f32 %v229, %v289
  %v322 = vadd.f32 %v230, %v290
  %v323 = vadd.f32 %v231, %v291
  %v324 = vadd.f32 %v232, %v292
  %v325 = vadd.f32 %v233, %v293
  %v326 = vadd.f32 %v234, %v294
  %v327 = vadd.f32 %v235, %v295
  %v328 = vadd.f32 %v236, %v296
  %v329 = vadd.f32 %v237, %v297
  %v330 = vadd.f32 %v238, %v298
  %v331 = vadd.f32 %v239, %v299
  %v332 = vadd.f32 %v240, %v300
  %v333 = vadd.f32 %v241, %v301
  %v334 = vadd.f32 %v242, %v302
  %v335 = vadd.f32 %v243, %v303
  %v336 = vadd.f32 %v244, %v304
  %v337 = vadd.f32 %v245, %v305
  %v338 = vadd.f32 %v246, %v306
  %v339 = vadd.f32 %v247, %v307
  %v340 = vadd.f32 %v248, %v308
  %v341 = vadd.f32 %v249, %v309
  %v342 = vadd.f32 %v250, %v310
  %v343 = vadd.f32 %v251, %v311
  %v344 = vadd.f32 %v252, %v312
  %v345 = vadd.f32 %v253, %v313
  %v346 = vadd.f32 %v254, %v314
  %v347 = vadd.f32 %v255, %v315
  %v348 = vadd.f32 %v256, %v316
  %v349 = vadd.f32 %v257, %v317
  %v350 = vadd.f32 %v258, %v318
  %v351 = vadd.f32 %v259, %v319
  %v352 = vadd.f32 %v10, 0.0
  %v353 = vadd.f32 %v11, 0.0
  %v354 = vadd.f32 %v8, %v12
  %v355 = vadd.f32 %v9, %v13
  %v356 = vadd.f32 %v10, %v14
  %v357 = vadd.f32 %v11, %v15
  %v358 = vadd.f32 %v12, %v16
  %v359 = vadd.f32 %v13, %v17
  %v360 = vadd.f32 %v14, %v18
  %v361 = vadd.f32 %v15, %v19
  %v362 = vadd.f32 %v16, %v20
  %v363 = vadd.f32 %v17, %v21
  %v364 = vadd.f32 %v18, %v22
  %v365 = vadd.f32 %v19, %v23
  %v366 = vadd.f32 %v20, %v24
  %v367 = vadd.f32 %v21, %v25
  %v368 = vadd.f32 %v22, %v26
  %v369 = vadd.f32 %v23, %v27
  %v370 = vadd.f32 %v24, %v28
  %v371 = vadd.f32 %v25, %v29
  %v372 = vadd.f32 %v26, %v30
  %v373 = vadd.f32 %v27, %v31
  %v374 = vadd.f32 %v28, %v32
  %v375 = vadd.f32 %v29, %v33
  %v376 = vadd.f32 %v30, %v34
  %v377 = vadd.f32 %v31, %v35
  %v378 = vadd.f32 %v32, %v36
  %v379 = vadd.f32 %v33, %v37
  %v380 = vadd.f32 %v34, %v38
  %v381 = vadd.f32 %v35, %v39
  %v382 = vadd.f32 %v36, 0.0
  %v383 = vadd.f32 %v37, 0.0
  %v384 = vmul.f32 %v352, 0.24197073
  %v385 = vmul.f32 %v353, 0.24197073
  %v386 = vmul.f32 %v354, 0.24197073
  %v387 = vmul.f32 %v355, 0.24197073
  %v388 = vmul.f32 %v356, 0.24197073
  %v389 = vmul.f32 %v357, 0.24197073
  %v390 = vmul.f32 %v358, 0.24197073
  %v391 = vmul.f32 %v359, 0.24197073
  %v392 = vmul.f32 %v360, 0.24197073
  %v393 = vmul.f32 %v361, 0.24197073
  %v394 = vmul.f32 %v362, 0.24197073
  %v395 = vmul.f32 %v363, 0.24197073
  %v396 = vmul.f32 %v364, 0.24197073
  %v397 = vmul.f32 %v365, 0.24197073
  %v398 = vmul.f32 %v366, 0.24197073
  %v399 = vmul.f32 %v367, 0.24197073
  %v400 = vmul.f32 %v368, 0.24197073
  %v401 = vmul.f32 %v369, 0.24197073
  %v402 = vmul.f32 %v370, 0.24197073
  %v403 = vmul.f32 %v371, 0.24197073
  %v404 = vmul.f32 %v372, 0.24197073
  %v405 = vmul.f32 %v373, 0.24197073
  %v406 = vmul.f32 %v374, 0.24197073
  %v407 = vmul.f32 %v375, 0.24197073
  %v408 = vmul.f32 %v376, 0.24197073
  %v409 = vmul.f32 %v377, 0.24197073
  %v410 = vmul.f32 %v378, 0.24197073
  %v411 = vmul.f32 %v379, 0.24197073
  %v412 = vmul.f32 %v380, 0.24197073
  %v413 = vmul.f32 %v381, 0.24197073
  %v414 = vmul.f32 %v382, 0.24197073
  %v415 = vmul.f32 %v383, 0.24197073
  %v416 = vadd.f32 %v180, %v384
  %v417 = vadd.f32 %v181, %v385
  %v418 = vadd.f32 %v182, %v386
  %v419 = vadd.f32 %v183, %v387
  %v420 = vadd.f32 %v184, %v388
  %v421 = vadd.f32 %v185, %v389
  %v422 = vadd.f32 %v186, %v390
  %v423 = vadd.f32 %v187, %v391
  %v424 = vadd.f32 %v188, %v392
  %v425 = vadd.f32 %v189, %v393
  %v426 = vadd.f32 %v190, %v394
  %v427 = vadd.f32 %v191, %v395
  %v428 = vadd.f32 %v192, %v396
  %v429 = vadd.f32 %v193, %v397
  %v430 = vadd.f32 %v194, %v398
  %v431 = vadd.f32 %v195, %v399
  %v432 = vadd.f32 %v196, %v400
  %v433 = vadd.f32 %v197, %v401
  %v434 = vadd.f32 %v198, %v402
  %v435 = vadd.f32 %v199, %v403
  %v436 = vadd.f32 %v200, %v404
  %v437 = vadd.f32 %v201, %v405
  %v438 = vadd.f32 %v202, %v406
  %v439 = vadd.f32 %v203, %v407
  %v440 = vadd.f32 %v204, %v408
  %v441 = vadd.f32 %v205, %v409
  %v442 = vadd.f32 %v206, %v410
  %v443 = vadd.f32 %v207, %v411
  %v444 = vadd.f32 %v208, %v412
  %v445 = vadd.f32 %v209, %v413
  %v446 = vadd.f32 %v210, %v414
  %v447 = vadd.f32 %v211, %v415
  %v448 = vadd.f32 %v416, %v320
  %v449 = vadd.f32 %v417, %v321
  %v450 = vadd.f32 %v418, %v322
  %v451 = vadd.f32 %v419, %v323
  %v452 = vadd.f32 %v420, %v324
  %v453 = vadd.f32 %v421, %v325
  %v454 = vadd.f32 %v422, %v326
  %v455 = vadd.f32 %v423, %v327
  %v456 = vadd.f32 %v424, %v328
  %v457 = vadd.f32 %v425, %v329
  %v458 = vadd.f32 %v426, %v330
  %v459 = vadd.f32 %v427, %v331
  %v460 = vadd.f32 %v428, %v332
  %v461 = vadd.f32 %v429, %v333
  %v462 = vadd.f32 %v430, %v334
  %v463 = vadd.f32 %v431, %v335
  %v464 = vadd.f32 %v432, %v336
  %v465 = vadd.f32 %v433, %v337
  %v466 = vadd.f32 %v434, %v338
  %v467 = vadd.f32 %v435, %v339
  %v468 = vadd.f32 %v436, %v340
  %v469 = vadd.f32 %v437, %v341
  %v470 = vadd.f32 %v438, %v342
  %v471 = vadd.f32 %v439, %v343
  %v472 = vadd.f32 %v440, %v344
  %v473 = vadd.f32 %v441, %v345
  %v474 = vadd.f32 %v442, %v346
  %v475 = vadd.f32 %v443, %v347
  %v476 = vadd.f32 %v444, %v348
  %v477 = vadd.f32 %v445, %v349
  %v478 = vadd.f32 %v446, %v350
  %v479 = vadd.f32 %v447, %v351
  %v480 = vadd.f32 %v448, %v40
  %v481 = vadd.f32 %v449, %v41
  %v482 = vadd.f32 %v450, %v42
  %v483 = vadd.f32 %v451, %v43
  %v484 = vadd.f32 %v452, %v44
  %v485 = vadd.f32 %v453, %v45
  %v486 = vadd.f32 %v454, %v46
  %v487 = vadd.f32 %v455, %v47
  %v488 = vadd.f32 %v456, %v48
  %v489 = vadd.f32 %v457, %v49
  %v490 = vadd.f32 %v458, %v50
  %v491 = vadd.f32 %v459, %v51
  %v492 = vadd.f32 %v460, %v52
  %v493 = vadd.f32 %v461, %v53
  %v494 = vadd.f32 %v462, %v54
  %v495 = vadd.f32 %v463, %v55
  %v496 = vadd.f32 %v464, %v56
  %v497 = vadd.f32 %v465, %v57
  %v498 = vadd.f32 %v466, %v58
  %v499 = vadd.f32 %v467, %v59
  %v500 = vadd.f32 %v468, %v60
  %v501 = vadd.f32 %v469, %v61
  %v502 = vadd.f32 %v470, %v62
  %v503 = vadd.f32 %v471, %v63
  %v504 = vadd.f32 %v472, %v64
  %v505 = vadd.f32 %v473, %v65
  %v506 = vadd.f32 %v474, %v66
  %v507 = vadd.f32 %v475, %v67
  %v508 = vadd.f32 %v476, %v68
  %v509 = vadd.f32 %v477, %v69
  %v510 = vadd.f32 %v478, %v70
  %v511 = vadd.f32 %v479, %v71
  %vm512 = vcmask 64512
  %513 = vst.msk [vmem:[#allocation2] sm:$0xff] %vm512, 0.0
  %514 = vst.msk [vmem:[#allocation2 + $0x20] sm:$0xff] %vm512, 0.0
  %515 = vst.msk [vmem:[#allocation2 + $0x40] sm:$0xff] %vm512, 0.0
  %516 = vst.msk [vmem:[#allocation2 + $0x60] sm:$0xff] %vm512, 0.0
  %517 = vst.msk [vmem:[#allocation2 + $0x80] sm:$0xff] %vm512, 0.0
  %518 = vst.msk [vmem:[#allocation2 + $0xa0] sm:$0xff] %vm512, 0.0
  %519 = vst.msk [vmem:[#allocation2 + $0xc0] sm:$0xff] %vm512, 0.0
  %520 = vst.msk [vmem:[#allocation2 + $0xe0] sm:$0xff] %vm512, 0.0
  %521 = vst.msk [vmem:[#allocation2 + $0x100] sm:$0xff] %vm512, 0.0
  %522 = vst.msk [vmem:[#allocation2 + $0x120] sm:$0xff] %vm512, 0.0
  %523 = vst.msk [vmem:[#allocation2 + $0x140] sm:$0xff] %vm512, 0.0
  %524 = vst.msk [vmem:[#allocation2 + $0x160] sm:$0xff] %vm512, 0.0
  %525 = vst.msk [vmem:[#allocation2 + $0x180] sm:$0xff] %vm512, 0.0
  %526 = vst.msk [vmem:[#allocation2 + $0x1a0] sm:$0xff] %vm512, 0.0
  %527 = vst.msk [vmem:[#allocation2 + $0x1c0] sm:$0xff] %vm512, 0.0
  %528 = vst.msk [vmem:[#allocation2 + $0x1e0] sm:$0xff] %vm512, 0.0
  %529 = vst.msk [vmem:[#allocation2 + $0x18] sm:$0xff] %vm512, 0.0
  %530 = vst.msk [vmem:[#allocation2 + $0x38] sm:$0xff] %vm512, 0.0
  %531 = vst.msk [vmem:[#allocation2 + $0x58] sm:$0xff] %vm512, 0.0
  %532 = vst.msk [vmem:[#allocation2 + $0x78] sm:$0xff] %vm512, 0.0
  %533 = vst.msk [vmem:[#allocation2 + $0x98] sm:$0xff] %vm512, 0.0
  %534 = vst.msk [vmem:[#allocation2 + $0xb8] sm:$0xff] %vm512, 0.0
  %535 = vst.msk [vmem:[#allocation2 + $0xd8] sm:$0xff] %vm512, 0.0
  %536 = vst.msk [vmem:[#allocation2 + $0xf8] sm:$0xff] %vm512, 0.0
  %537 = vst.msk [vmem:[#allocation2 + $0x118] sm:$0xff] %vm512, 0.0
  %538 = vst.msk [vmem:[#allocation2 + $0x138] sm:$0xff] %vm512, 0.0
  %539 = vst.msk [vmem:[#allocation2 + $0x158] sm:$0xff] %vm512, 0.0
  %540 = vst.msk [vmem:[#allocation2 + $0x178] sm:$0xff] %vm512, 0.0
  %541 = vst.msk [vmem:[#allocation2 + $0x198] sm:$0xff] %vm512, 0.0
  %542 = vst.msk [vmem:[#allocation2 + $0x1b8] sm:$0xff] %vm512, 0.0
  %543 = vst.msk [vmem:[#allocation2 + $0x1d8] sm:$0xff] %vm512, 0.0
  %544 = vst.msk [vmem:[#allocation2 + $0x1f8] sm:$0xff] %vm512, 0.0
  %545 = vst.msk [vmem:[#allocation2 + $0x8] sm:$0xff] %vm512, %v480
  %546 = vst.msk [vmem:[#allocation2 + $0x10] sm:$0xff] %vm512, %v481
  %547 = vst.msk [vmem:[#allocation2 + $0x28] sm:$0xff] %vm512, %v482
  %548 = vst.msk [vmem:[#allocation2 + $0x30] sm:$0xff] %vm512, %v483
  %549 = vst.msk [vmem:[#allocation2 + $0x48] sm:$0xff] %vm512, %v484
  %550 = vst.msk [vmem:[#allocation2 + $0x50] sm:$0xff] %vm512, %v485
  %551 = vst.msk [vmem:[#allocation2 + $0x68] sm:$0xff] %vm512, %v486
  %552 = vst.msk [vmem:[#allocation2 + $0x70] sm:$0xff] %vm512, %v487
  %553 = vst.msk [vmem:[#allocation2 + $0x88] sm:$0xff] %vm512, %v488
  %554 = vst.msk [vmem:[#allocation2 + $0x90] sm:$0xff] %vm512, %v489
  %555 = vst.msk [vmem:[#allocation2 + $0xa8] sm:$0xff] %vm512, %v490
  %556 = vst.msk [vmem:[#allocation2 + $0xb0] sm:$0xff] %vm512, %v491
  %557 = vst.msk [vmem:[#allocation2 + $0xc8] sm:$0xff] %vm512, %v492
  %558 = vst.msk [vmem:[#allocation2 + $0xd0] sm:$0xff] %vm512, %v493
  %559 = vst.msk [vmem:[#allocation2 + $0xe8] sm:$0xff] %vm512, %v494
  %560 = vst.msk [vmem:[#allocation2 + $0xf0] sm:$0xff] %vm512, %v495
  %561 = vst.msk [vmem:[#allocation2 + $0x108] sm:$0xff] %vm512, %v496
  %562 = vst.msk [vmem:[#allocation2 + $0x110] sm:$0xff] %vm512, %v497
  %563 = vst.msk [vmem:[#allocation2 + $0x128] sm:$0xff] %vm512, %v498
  %564 = vst.msk [vmem:[#allocation2 + $0x130] sm:$0xff] %vm512, %v499
  %565 = vst.msk [vmem:[#allocation2 + $0x148] sm:$0xff] %vm512, %v500
  %566 = vst.msk [vmem:[#allocation2 + $0x150] sm:$0xff] %vm512, %v501
  %567 = vst.msk [vmem:[#allocation2 + $0x168] sm:$0xff] %vm512, %v502
  %568 = vst.msk [vmem:[#allocation2 + $0x170] sm:$0xff] %vm512, %v503
  %569 = vst.msk [vmem:[#allocation2 + $0x188] sm:$0xff] %vm512, %v504
  %570 = vst.msk [vmem:[#allocation2 + $0x190] sm:$0xff] %vm512, %v505
  %571 = vst.msk [vmem:[#allocation2 + $0x1a8] sm:$0xff] %vm512, %v506
  %572 = vst.msk [vmem:[#allocation2 + $0x1b0] sm:$0xff] %vm512, %v507
  %573 = vst.msk [vmem:[#allocation2 + $0x1c8] sm:$0xff] %vm512, %v508
  %574 = vst.msk [vmem:[#allocation2 + $0x1d0] sm:$0xff] %vm512, %v509
  %575 = vst.msk [vmem:[#allocation2 + $0x1e8] sm:$0xff] %vm512, %v510
  %576 = vst.msk [vmem:[#allocation2 + $0x1f0] sm:$0xff] %vm512, %v511
  %v577 = vld [vmem:[#allocation2 + $0x8] sm:$0xff]
  %v578 = vld [vmem:[#allocation2 + $0x10] sm:$0xff]
  %v579 = vld [vmem:[#allocation2 + $0x28] sm:$0xff]
  %v580 = vld [vmem:[#allocation2 + $0x30] sm:$0xff]
  %v581 = vld [vmem:[#allocation2 + $0x48] sm:$0xff]
  %v582 = vld [vmem:[#allocation2 + $0x50] sm:$0xff]
  %v583 = vld [vmem:[#allocation2 + $0x68] sm:$0xff]
  %v584 = vld [vmem:[#allocation2 + $0x70] sm:$0xff]
  %v585 = vld [vmem:[#allocation2 + $0x88] sm:$0xff]
  %v586 = vld [vmem:[#allocation2 + $0x90] sm:$0xff]
  %v587 = vld [vmem:[#allocation2 + $0xa8] sm:$0xff]
  %v588 = vld [vmem:[#allocation2 + $0xb0] sm:$0xff]
  %v589 = vld [vmem:[#allocation2 + $0xc8] sm:$0xff]
  %v590 = vld [vmem:[#allocation2 + $0xd0] sm:$0xff]
  %v591 = vld [vmem:[#allocation2 + $0xe8] sm:$0xff]
  %v592 = vld [vmem:[#allocation2 + $0xf0] sm:$0xff]
  %v593 = vld [vmem:[#allocation2 + $0x108] sm:$0xff]
  %v594 = vld [vmem:[#allocation2 + $0x110] sm:$0xff]
  %v595 = vld [vmem:[#allocation2 + $0x128] sm:$0xff]
  %v596 = vld [vmem:[#allocation2 + $0x130] sm:$0xff]
  %v597 = vld [vmem:[#allocation2 + $0x148] sm:$0xff]
  %v598 = vld [vmem:[#allocation2 + $0x150] sm:$0xff]
  %v599 = vld [vmem:[#allocation2 + $0x168] sm:$0xff]
  %v600 = vld [vmem:[#allocation2 + $0x170] sm:$0xff]
  %v601 = vld [vmem:[#allocation2 + $0x188] sm:$0xff]
  %v602 = vld [vmem:[#allocation2 + $0x190] sm:$0xff]
  %v603 = vld [vmem:[#allocation2 + $0x1a8] sm:$0xff]
  %v604 = vld [vmem:[#allocation2 + $0x1b0] sm:$0xff]
  %v605 = vld [vmem:[#allocation2 + $0x1c8] sm:$0xff]
  %v606 = vld [vmem:[#allocation2 + $0x1d0] sm:$0xff]
  %v607 = vld [vmem:[#allocation2 + $0x1e8] sm:$0xff]
  %v608 = vld [vmem:[#allocation2 + $0x1f0] sm:$0xff]
  %v609 = vmul.f32 %v577, 0.3989423
  %v610 = vmul.f32 %v578, 0.3989423
  %v611 = vmul.f32 %v579, 0.3989423
  %v612 = vmul.f32 %v580, 0.3989423
  %v613 = vmul.f32 %v581, 0.3989423
  %v614 = vmul.f32 %v582, 0.3989423
  %v615 = vmul.f32 %v583, 0.3989423
  %v616 = vmul.f32 %v584, 0.3989423
  %v617 = vmul.f32 %v585, 0.3989423
  %v618 = vmul.f32 %v586, 0.3989423
  %v619 = vmul.f32 %v587, 0.3989423
  %v620 = vmul.f32 %v588, 0.3989423
  %v621 = vmul.f32 %v589, 0.3989423
  %v622 = vmul.f32 %v590, 0.3989423
  %v623 = vmul.f32 %v591, 0.3989423
  %v624 = vmul.f32 %v592, 0.3989423
  %v625 = vmul.f32 %v593, 0.3989423
  %v626 = vmul.f32 %v594, 0.3989423
  %v627 = vmul.f32 %v595, 0.3989423
  %v628 = vmul.f32 %v596, 0.3989423
  %v629 = vmul.f32 %v597, 0.3989423
  %v630 = vmul.f32 %v598, 0.3989423
  %v631 = vmul.f32 %v599, 0.3989423
  %v632 = vmul.f32 %v600, 0.3989423
  %v633 = vmul.f32 %v601, 0.3989423
  %v634 = vmul.f32 %v602, 0.3989423
  %v635 = vmul.f32 %v603, 0.3989423
  %v636 = vmul.f32 %v604, 0.3989423
  %v637 = vmul.f32 %v605, 0.3989423
  %v638 = vmul.f32 %v606, 0.3989423
  %v639 = vmul.f32 %v607, 0.3989423
  %v640 = vmul.f32 %v608, 0.3989423
  %v641 = vld [vmem:[#allocation2 + $0x3] sm:$0xff]
  %v642 = vld [vmem:[#allocation2 + $0xb] sm:$0xff]
  %v643 = vld [vmem:[#allocation2 + $0x23] sm:$0xff]
  %v644 = vld [vmem:[#allocation2 + $0x2b] sm:$0xff]
  %v645 = vld [vmem:[#allocation2 + $0x43] sm:$0xff]
  %v646 = vld [vmem:[#allocation2 + $0x4b] sm:$0xff]
  %v647 = vld [vmem:[#allocation2 + $0x63] sm:$0xff]
  %v648 = vld [vmem:[#allocation2 + $0x6b] sm:$0xff]
  %v649 = vld [vmem:[#allocation2 + $0x83] sm:$0xff]
  %v650 = vld [vmem:[#allocation2 + $0x8b] sm:$0xff]
  %v651 = vld [vmem:[#allocation2 + $0xa3] sm:$0xff]
  %v652 = vld [vmem:[#allocation2 + $0xab] sm:$0xff]
  %v653 = vld [vmem:[#allocation2 + $0xc3] sm:$0xff]
  %v654 = vld [vmem:[#allocation2 + $0xcb] sm:$0xff]
  %v655 = vld [vmem:[#allocation2 + $0xe3] sm:$0xff]
  %v656 = vld [vmem:[#allocation2 + $0xeb] sm:$0xff]
  %v657 = vld [vmem:[#allocation2 + $0x103] sm:$0xff]
  %v658 = vld [vmem:[#allocation2 + $0x10b] sm:$0xff]
  %v659 = vld [vmem:[#allocation2 + $0x123] sm:$0xff]
  %v660 = vld [vmem:[#allocation2 + $0x12b] sm:$0xff]
  %v661 = vld [vmem:[#allocation2 + $0x143] sm:$0xff]
  %v662 = vld [vmem:[#allocation2 + $0x14b] sm:$0xff]
  %v663 = vld [vmem:[#allocation2 + $0x163] sm:$0xff]
  %v664 = vld [vmem:[#allocation2 + $0x16b] sm:$0xff]
  %v665 = vld [vmem:[#allocation2 + $0x183] sm:$0xff]
  %v666 = vld [vmem:[#allocation2 + $0x18b] sm:$0xff]
  %v667 = vld [vmem:[#allocation2 + $0x1a3] sm:$0xff]
  %v668 = vld [vmem:[#allocation2 + $0x1ab] sm:$0xff]
  %v669 = vld [vmem:[#allocation2 + $0x1c3] sm:$0xff]
  %v670 = vld [vmem:[#allocation2 + $0x1cb] sm:$0xff]
  %v671 = vld [vmem:[#allocation2 + $0x1e3] sm:$0xff]
  %v672 = vld [vmem:[#allocation2 + $0x1eb] sm:$0xff]
  %v673 = vld [vmem:[#allocation2 + $0xd] sm:$0xff]
  %v674 = vld [vmem:[#allocation2 + $0x15] sm:$0xff]
  %v675 = vld [vmem:[#allocation2 + $0x2d] sm:$0xff]
  %v676 = vld [vmem:[#allocation2 + $0x35] sm:$0xff]
  %v677 = vld [vmem:[#allocation2 + $0x4d] sm:$0xff]
  %v678 = vld [vmem:[#allocation2 + $0x55] sm:$0xff]
  %v679 = vld [vmem:[#allocation2 + $0x6d] sm:$0xff]
  %v680 = vld [vmem:[#allocation2 + $0x75] sm:$0xff]
  %v681 = vld [vmem:[#allocation2 + $0x8d] sm:$0xff]
  %v682 = vld [vmem:[#allocation2 + $0x95] sm:$0xff]
  %v683 = vld [vmem:[#allocation2 + $0xad] sm:$0xff]
  %v684 = vld [vmem:[#allocation2 + $0xb5] sm:$0xff]
  %v685 = vld [vmem:[#allocation2 + $0xcd] sm:$0xff]
  %v686 = vld [vmem:[#allocation2 + $0xd5] sm:$0xff]
  %v687 = vld [vmem:[#allocation2 + $0xed] sm:$0xff]
  %v688 = vld [vmem:[#allocation2 + $0xf5] sm:$0xff]
  %v689 = vld [vmem:[#allocation2 + $0x10d] sm:$0xff]
  %v690 = vld [vmem:[#allocation2 + $0x115] sm:$0xff]
  %v691 = vld [vmem:[#allocation2 + $0x12d] sm:$0xff]
  %v692 = vld [vmem:[#allocation2 + $0x135] sm:$0xff]
  %v693 = vld [vmem:[#allocation2 + $0x14d] sm:$0xff]
  %v694 = vld [vmem:[#allocation2 + $0x155] sm:$0xff]
  %v695 = vld [vmem:[#allocation2 + $0x16d] sm:$0xff]
  %v696 = vld [vmem:[#allocation2 + $0x175] sm:$0xff]
  %v697 = vld [vmem:[#allocation2 + $0x18d] sm:$0xff]
  %v698 = vld [vmem:[#allocation2 + $0x195] sm:$0xff]
  %v699 = vld [vmem:[#allocation2 + $0x1ad] sm:$0xff]
  %v700 = vld [vmem:[#allocation2 + $0x1b5] sm:$0xff]
  %v701 = vld [vmem:[#allocation2 + $0x1cd] sm:$0xff]
  %v702 = vld [vmem:[#allocation2 + $0x1d5] sm:$0xff]
  %v703 = vld [vmem:[#allocation2 + $0x1ed] sm:$0xff]
  %v704 = vld [vmem:[#allocation2 + $0x1f5] sm:$0xff]
  %v705 = vadd.f32 %v641, %v673
  %v706 = vadd.f32 %v642, %v674
  %v707 = vadd.f32 %v643, %v675
  %v708 = vadd.f32 %v644, %v676
  %v709 = vadd.f32 %v645, %v677
  %v710 = vadd.f32 %v646, %v678
  %v711 = vadd.f32 %v647, %v679
  %v712 = vadd.f32 %v648, %v680
  %v713 = vadd.f32 %v649, %v681
  %v714 = vadd.f32 %v650, %v682
  %v715 = vadd.f32 %v651, %v683
  %v716 = vadd.f32 %v652, %v684
  %v717 = vadd.f32 %v653, %v685
  %v718 = vadd.f32 %v654, %v686
  %v719 = vadd.f32 %v655, %v687
  %v720 = vadd.f32 %v656, %v688
  %v721 = vadd.f32 %v657, %v689
  %v722 = vadd.f32 %v658, %v690
  %v723 = vadd.f32 %v659, %v691
  %v724 = vadd.f32 %v660, %v692
  %v725 = vadd.f32 %v661, %v693
  %v726 = vadd.f32 %v662, %v694
  %v727 = vadd.f32 %v663, %v695
  %v728 = vadd.f32 %v664, %v696
  %v729 = vadd.f32 %v665, %v697
  %v730 = vadd.f32 %v666, %v698
  %v731 = vadd.f32 %v667, %v699
  %v732 = vadd.f32 %v668, %v700
  %v733 = vadd.f32 %v669, %v701
  %v734 = vadd.f32 %v670, %v702
  %v735 = vadd.f32 %v671, %v703
  %v736 = vadd.f32 %v672, %v704
  %v737 = vmul.f32 %v705, 1.4867195e-06
  %v738 = vmul.f32 %v706, 1.4867195e-06
  %v739 = vmul.f32 %v707, 1.4867195e-06
  %v740 = vmul.f32 %v708, 1.4867195e-06
  %v741 = vmul.f32 %v709, 1.4867195e-06
  %v742 = vmul.f32 %v710, 1.4867195e-06
  %v743 = vmul.f32 %v711, 1.4867195e-06
  %v744 = vmul.f32 %v712, 1.4867195e-06
  %v745 = vmul.f32 %v713, 1.4867195e-06
  %v746 = vmul.f32 %v714, 1.4867195e-06
  %v747 = vmul.f32 %v715, 1.4867195e-06
  %v748 = vmul.f32 %v716, 1.4867195e-06
  %v749 = vmul.f32 %v717, 1.4867195e-06
  %v750 = vmul.f32 %v718, 1.4867195e-06
  %v751 = vmul.f32 %v719, 1.4867195e-06
  %v752 = vmul.f32 %v720, 1.4867195e-06
  %v753 = vmul.f32 %v721, 1.4867195e-06
  %v754 = vmul.f32 %v722, 1.4867195e-06
  %v755 = vmul.f32 %v723, 1.4867195e-06
  %v756 = vmul.f32 %v724, 1.4867195e-06
  %v757 = vmul.f32 %v725, 1.4867195e-06
  %v758 = vmul.f32 %v726, 1.4867195e-06
  %v759 = vmul.f32 %v727, 1.4867195e-06
  %v760 = vmul.f32 %v728, 1.4867195e-06
  %v761 = vmul.f32 %v729, 1.4867195e-06
  %v762 = vmul.f32 %v730, 1.4867195e-06
  %v763 = vmul.f32 %v731, 1.4867195e-06
  %v764 = vmul.f32 %v732, 1.4867195e-06
  %v765 = vmul.f32 %v733, 1.4867195e-06
  %v766 = vmul.f32 %v734, 1.4867195e-06
  %v767 = vmul.f32 %v735, 1.4867195e-06
  %v768 = vmul.f32 %v736, 1.4867195e-06
  %v769 = vld [vmem:[#allocation2 + $0x5] sm:$0xff]
  %v770 = vld [vmem:[#allocation2 + $0x25] sm:$0xff]
  %v771 = vld [vmem:[#allocation2 + $0x45] sm:$0xff]
  %v772 = vld [vmem:[#allocation2 + $0x65] sm:$0xff]
  %v773 = vld [vmem:[#allocation2 + $0x85] sm:$0xff]
  %v774 = vld [vmem:[#allocation2 + $0xa5] sm:$0xff]
  %v775 = vld [vmem:[#allocation2 + $0xc5] sm:$0xff]
  %v776 = vld [vmem:[#allocation2 + $0xe5] sm:$0xff]
  %v777 = vld [vmem:[#allocation2 + $0x105] sm:$0xff]
  %v778 = vld [vmem:[#allocation2 + $0x125] sm:$0xff]
  %v779 = vld [vmem:[#allocation2 + $0x145] sm:$0xff]
  %v780 = vld [vmem:[#allocation2 + $0x165] sm:$0xff]
  %v781 = vld [vmem:[#allocation2 + $0x185] sm:$0xff]
  %v782 = vld [vmem:[#allocation2 + $0x1a5] sm:$0xff]
  %v783 = vld [vmem:[#allocation2 + $0x1c5] sm:$0xff]
  %v784 = vld [vmem:[#allocation2 + $0x1e5] sm:$0xff]
  %v785 = vld [vmem:[#allocation2 + $0x13] sm:$0xff]
  %v786 = vld [vmem:[#allocation2 + $0x33] sm:$0xff]
  %v787 = vld [vmem:[#allocation2 + $0x53] sm:$0xff]
  %v788 = vld [vmem:[#allocation2 + $0x73] sm:$0xff]
  %v789 = vld [vmem:[#allocation2 + $0x93] sm:$0xff]
  %v790 = vld [vmem:[#allocation2 + $0xb3] sm:$0xff]
  %v791 = vld [vmem:[#allocation2 + $0xd3] sm:$0xff]
  %v792 = vld [vmem:[#allocation2 + $0xf3] sm:$0xff]
  %v793 = vld [vmem:[#allocation2 + $0x113] sm:$0xff]
  %v794 = vld [vmem:[#allocation2 + $0x133] sm:$0xff]
  %v795 = vld [vmem:[#allocation2 + $0x153] sm:$0xff]
  %v796 = vld [vmem:[#allocation2 + $0x173] sm:$0xff]
  %v797 = vld [vmem:[#allocation2 + $0x193] sm:$0xff]
  %v798 = vld [vmem:[#allocation2 + $0x1b3] sm:$0xff]
  %v799 = vld [vmem:[#allocation2 + $0x1d3] sm:$0xff]
  %v800 = vld [vmem:[#allocation2 + $0x1f3] sm:$0xff]
  %v801 = vadd.f32 %v769, %v642
  %v802 = vadd.f32 %v673, %v785
  %v803 = vadd.f32 %v770, %v644
  %v804 = vadd.f32 %v675, %v786
  %v805 = vadd.f32 %v771, %v646
  %v806 = vadd.f32 %v677, %v787
  %v807 = vadd.f32 %v772, %v648
  %v808 = vadd.f32 %v679, %v788
  %v809 = vadd.f32 %v773, %v650
  %v810 = vadd.f32 %v681, %v789
  %v811 = vadd.f32 %v774, %v652
  %v812 = vadd.f32 %v683, %v790
  %v813 = vadd.f32 %v775, %v654
  %v814 = vadd.f32 %v685, %v791
  %v815 = vadd.f32 %v776, %v656
  %v816 = vadd.f32 %v687, %v792
  %v817 = vadd.f32 %v777, %v658
  %v818 = vadd.f32 %v689, %v793
  %v819 = vadd.f32 %v778, %v660
  %v820 = vadd.f32 %v691, %v794
  %v821 = vadd.f32 %v779, %v662
  %v822 = vadd.f32 %v693, %v795
  %v823 = vadd.f32 %v780, %v664
  %v824 = vadd.f32 %v695, %v796
  %v825 = vadd.f32 %v781, %v666
  %v826 = vadd.f32 %v697, %v797
  %v827 = vadd.f32 %v782, %v668
  %v828 = vadd.f32 %v699, %v798
  %v829 = vadd.f32 %v783, %v670
  %v830 = vadd.f32 %v701, %v799
  %v831 = vadd.f32 %v784, %v672
  %v832 = vadd.f32 %v703, %v800
  %v833 = vmul.f32 %v801, 0.0044318484
  %v834 = vmul.f32 %v802, 0.0044318484
  %v835 = vmul.f32 %v803, 0.0044318484
  %v836 = vmul.f32 %v804, 0.0044318484
  %v837 = vmul.f32 %v805, 0.0044318484
  %v838 = vmul.f32 %v806, 0.0044318484
  %v839 = vmul.f32 %v807, 0.0044318484
  %v840 = vmul.f32 %v808, 0.0044318484
  %v841 = vmul.f32 %v809, 0.0044318484
  %v842 = vmul.f32 %v810, 0.0044318484
  %v843 = vmul.f32 %v811, 0.0044318484
  %v844 = vmul.f32 %v812, 0.0044318484
  %v845 = vmul.f32 %v813, 0.0044318484
  %v846 = vmul.f32 %v814, 0.0044318484
  %v847 = vmul.f32 %v815, 0.0044318484
  %v848 = vmul.f32 %v816, 0.0044318484
  %v849 = vmul.f32 %v817, 0.0044318484
  %v850 = vmul.f32 %v818, 0.0044318484
  %v851 = vmul.f32 %v819, 0.0044318484
  %v852 = vmul.f32 %v820, 0.0044318484
  %v853 = vmul.f32 %v821, 0.0044318484
  %v854 = vmul.f32 %v822, 0.0044318484
  %v855 = vmul.f32 %v823, 0.0044318484
  %v856 = vmul.f32 %v824, 0.0044318484
  %v857 = vmul.f32 %v825, 0.0044318484
  %v858 = vmul.f32 %v826, 0.0044318484
  %v859 = vmul.f32 %v827, 0.0044318484
  %v860 = vmul.f32 %v828, 0.0044318484
  %v861 = vmul.f32 %v829, 0.0044318484
  %v862 = vmul.f32 %v830, 0.0044318484
  %v863 = vmul.f32 %v831, 0.0044318484
  %v864 = vmul.f32 %v832, 0.0044318484
  %v865 = vadd.f32 %v737, %v833
  %v866 = vadd.f32 %v738, %v834
  %v867 = vadd.f32 %v739, %v835
  %v868 = vadd.f32 %v740, %v836
  %v869 = vadd.f32 %v741, %v837
  %v870 = vadd.f32 %v742, %v838
  %v871 = vadd.f32 %v743, %v839
  %v872 = vadd.f32 %v744, %v840
  %v873 = vadd.f32 %v745, %v841
  %v874 = vadd.f32 %v746, %v842
  %v875 = vadd.f32 %v747, %v843
  %v876 = vadd.f32 %v748, %v844
  %v877 = vadd.f32 %v749, %v845
  %v878 = vadd.f32 %v750, %v846
  %v879 = vadd.f32 %v751, %v847
  %v880 = vadd.f32 %v752, %v848
  %v881 = vadd.f32 %v753, %v849
  %v882 = vadd.f32 %v754, %v850
  %v883 = vadd.f32 %v755, %v851
  %v884 = vadd.f32 %v756, %v852
  %v885 = vadd.f32 %v757, %v853
  %v886 = vadd.f32 %v758, %v854
  %v887 = vadd.f32 %v759, %v855
  %v888 = vadd.f32 %v760, %v856
  %v889 = vadd.f32 %v761, %v857
  %v890 = vadd.f32 %v762, %v858
  %v891 = vadd.f32 %v763, %v859
  %v892 = vadd.f32 %v764, %v860
  %v893 = vadd.f32 %v765, %v861
  %v894 = vadd.f32 %v766, %v862
  %v895 = vadd.f32 %v767, %v863
  %v896 = vadd.f32 %v768, %v864
  %v897 = vld [vmem:[#allocation2 + $0x4] sm:$0xff]
  %v898 = vld [vmem:[#allocation2 + $0xc] sm:$0xff]
  %v899 = vld [vmem:[#allocation2 + $0x24] sm:$0xff]
  %v900 = vld [vmem:[#allocation2 + $0x2c] sm:$0xff]
  %v901 = vld [vmem:[#allocation2 + $0x44] sm:$0xff]
  %v902 = vld [vmem:[#allocation2 + $0x4c] sm:$0xff]
  %v903 = vld [vmem:[#allocation2 + $0x64] sm:$0xff]
  %v904 = vld [vmem:[#allocation2 + $0x6c] sm:$0xff]
  %v905 = vld [vmem:[#allocation2 + $0x84] sm:$0xff]
  %v906 = vld [vmem:[#allocation2 + $0x8c] sm:$0xff]
  %v907 = vld [vmem:[#allocation2 + $0xa4] sm:$0xff]
  %v908 = vld [vmem:[#allocation2 + $0xac] sm:$0xff]
  %v909 = vld [vmem:[#allocation2 + $0xc4] sm:$0xff]
  %v910 = vld [vmem:[#allocation2 + $0xcc] sm:$0xff]
  %v911 = vld [vmem:[#allocation2 + $0xe4] sm:$0xff]
  %v912 = vld [vmem:[#allocation2 + $0xec] sm:$0xff]
  %v913 = vld [vmem:[#allocation2 + $0x104] sm:$0xff]
  %v914 = vld [vmem:[#allocation2 + $0x10c] sm:$0xff]
  %v915 = vld [vmem:[#allocation2 + $0x124] sm:$0xff]
  %v916 = vld [vmem:[#allocation2 + $0x12c] sm:$0xff]
  %v917 = vld [vmem:[#allocation2 + $0x144] sm:$0xff]
  %v918 = vld [vmem:[#allocation2 + $0x14c] sm:$0xff]
  %v919 = vld [vmem:[#allocation2 + $0x164] sm:$0xff]
  %v920 = vld [vmem:[#allocation2 + $0x16c] sm:$0xff]
  %v921 = vld [vmem:[#allocation2 + $0x184] sm:$0xff]
  %v922 = vld [vmem:[#allocation2 + $0x18c] sm:$0xff]
  %v923 = vld [vmem:[#allocation2 + $0x1a4] sm:$0xff]
  %v924 = vld [vmem:[#allocation2 + $0x1ac] sm:$0xff]
  %v925 = vld [vmem:[#allocation2 + $0x1c4] sm:$0xff]
  %v926 = vld [vmem:[#allocation2 + $0x1cc] sm:$0xff]
  %v927 = vld [vmem:[#allocation2 + $0x1e4] sm:$0xff]
  %v928 = vld [vmem:[#allocation2 + $0x1ec] sm:$0xff]
  %v929 = vld [vmem:[#allocation2 + $0x14] sm:$0xff]
  %v930 = vld [vmem:[#allocation2 + $0x34] sm:$0xff]
  %v931 = vld [vmem:[#allocation2 + $0x54] sm:$0xff]
  %v932 = vld [vmem:[#allocation2 + $0x74] sm:$0xff]
  %v933 = vld [vmem:[#allocation2 + $0x94] sm:$0xff]
  %v934 = vld [vmem:[#allocation2 + $0xb4] sm:$0xff]
  %v935 = vld [vmem:[#allocation2 + $0xd4] sm:$0xff]
  %v936 = vld [vmem:[#allocation2 + $0xf4] sm:$0xff]
  %v937 = vld [vmem:[#allocation2 + $0x114] sm:$0xff]
  %v938 = vld [vmem:[#allocation2 + $0x134] sm:$0xff]
  %v939 = vld [vmem:[#allocation2 + $0x154] sm:$0xff]
  %v940 = vld [vmem:[#allocation2 + $0x174] sm:$0xff]
  %v941 = vld [vmem:[#allocation2 + $0x194] sm:$0xff]
  %v942 = vld [vmem:[#allocation2 + $0x1b4] sm:$0xff]
  %v943 = vld [vmem:[#allocation2 + $0x1d4] sm:$0xff]
  %v944 = vld [vmem:[#allocation2 + $0x1f4] sm:$0xff]
  %v945 = vadd.f32 %v897, %v898
  %v946 = vadd.f32 %v898, %v929
  %v947 = vadd.f32 %v899, %v900
  %v948 = vadd.f32 %v900, %v930
  %v949 = vadd.f32 %v901, %v902
  %v950 = vadd.f32 %v902, %v931
  %v951 = vadd.f32 %v903, %v904
  %v952 = vadd.f32 %v904, %v932
  %v953 = vadd.f32 %v905, %v906
  %v954 = vadd.f32 %v906, %v933
  %v955 = vadd.f32 %v907, %v908
  %v956 = vadd.f32 %v908, %v934
  %v957 = vadd.f32 %v909, %v910
  %v958 = vadd.f32 %v910, %v935
  %v959 = vadd.f32 %v911, %v912
  %v960 = vadd.f32 %v912, %v936
  %v961 = vadd.f32 %v913, %v914
  %v962 = vadd.f32 %v914, %v937
  %v963 = vadd.f32 %v915, %v916
  %v964 = vadd.f32 %v916, %v938
  %v965 = vadd.f32 %v917, %v918
  %v966 = vadd.f32 %v918, %v939
  %v967 = vadd.f32 %v919, %v920
  %v968 = vadd.f32 %v920, %v940
  %v969 = vadd.f32 %v921, %v922
  %v970 = vadd.f32 %v922, %v941
  %v971 = vadd.f32 %v923, %v924
  %v972 = vadd.f32 %v924, %v942
  %v973 = vadd.f32 %v925, %v926
  %v974 = vadd.f32 %v926, %v943
  %v975 = vadd.f32 %v927, %v928
  %v976 = vadd.f32 %v928, %v944
  %v977 = vmul.f32 %v945, 0.00013383022
  %v978 = vmul.f32 %v946, 0.00013383022
  %v979 = vmul.f32 %v947, 0.00013383022
  %v980 = vmul.f32 %v948, 0.00013383022
  %v981 = vmul.f32 %v949, 0.00013383022
  %v982 = vmul.f32 %v950, 0.00013383022
  %v983 = vmul.f32 %v951, 0.00013383022
  %v984 = vmul.f32 %v952, 0.00013383022
  %v985 = vmul.f32 %v953, 0.00013383022
  %v986 = vmul.f32 %v954, 0.00013383022
  %v987 = vmul.f32 %v955, 0.00013383022
  %v988 = vmul.f32 %v956, 0.00013383022
  %v989 = vmul.f32 %v957, 0.00013383022
  %v990 = vmul.f32 %v958, 0.00013383022
  %v991 = vmul.f32 %v959, 0.00013383022
  %v992 = vmul.f32 %v960, 0.00013383022
  %v993 = vmul.f32 %v961, 0.00013383022
  %v994 = vmul.f32 %v962, 0.00013383022
  %v995 = vmul.f32 %v963, 0.00013383022
  %v996 = vmul.f32 %v964, 0.00013383022
  %v997 = vmul.f32 %v965, 0.00013383022
  %v998 = vmul.f32 %v966, 0.00013383022
  %v999 = vmul.f32 %v967, 0.00013383022
  %v1000 = vmul.f32 %v968, 0.00013383022
  %v1001 = vmul.f32 %v969, 0.00013383022
  %v1002 = vmul.f32 %v970, 0.00013383022
  %v1003 = vmul.f32 %v971, 0.00013383022
  %v1004 = vmul.f32 %v972, 0.00013383022
  %v1005 = vmul.f32 %v973, 0.00013383022
  %v1006 = vmul.f32 %v974, 0.00013383022
  %v1007 = vmul.f32 %v975, 0.00013383022
  %v1008 = vmul.f32 %v976, 0.00013383022
  %v1009 = vld [vmem:[#allocation2 + $0x6] sm:$0xff]
  %v1010 = vld [vmem:[#allocation2 + $0xe] sm:$0xff]
  %v1011 = vld [vmem:[#allocation2 + $0x26] sm:$0xff]
  %v1012 = vld [vmem:[#allocation2 + $0x2e] sm:$0xff]
  %v1013 = vld [vmem:[#allocation2 + $0x46] sm:$0xff]
  %v1014 = vld [vmem:[#allocation2 + $0x4e] sm:$0xff]
  %v1015 = vld [vmem:[#allocation2 + $0x66] sm:$0xff]
  %v1016 = vld [vmem:[#allocation2 + $0x6e] sm:$0xff]
  %v1017 = vld [vmem:[#allocation2 + $0x86] sm:$0xff]
  %v1018 = vld [vmem:[#allocation2 + $0x8e] sm:$0xff]
  %v1019 = vld [vmem:[#allocation2 + $0xa6] sm:$0xff]
  %v1020 = vld [vmem:[#allocation2 + $0xae] sm:$0xff]
  %v1021 = vld [vmem:[#allocation2 + $0xc6] sm:$0xff]
  %v1022 = vld [vmem:[#allocation2 + $0xce] sm:$0xff]
  %v1023 = vld [vmem:[#allocation2 + $0xe6] sm:$0xff]
  %v1024 = vld [vmem:[#allocation2 + $0xee] sm:$0xff]
  %v1025 = vld [vmem:[#allocation2 + $0x106] sm:$0xff]
  %v1026 = vld [vmem:[#allocation2 + $0x10e] sm:$0xff]
  %v1027 = vld [vmem:[#allocation2 + $0x126] sm:$0xff]
  %v1028 = vld [vmem:[#allocation2 + $0x12e] sm:$0xff]
  %v1029 = vld [vmem:[#allocation2 + $0x146] sm:$0xff]
  %v1030 = vld [vmem:[#allocation2 + $0x14e] sm:$0xff]
  %v1031 = vld [vmem:[#allocation2 + $0x166] sm:$0xff]
  %v1032 = vld [vmem:[#allocation2 + $0x16e] sm:$0xff]
  %v1033 = vld [vmem:[#allocation2 + $0x186] sm:$0xff]
  %v1034 = vld [vmem:[#allocation2 + $0x18e] sm:$0xff]
  %v1035 = vld [vmem:[#allocation2 + $0x1a6] sm:$0xff]
  %v1036 = vld [vmem:[#allocation2 + $0x1ae] sm:$0xff]
  %v1037 = vld [vmem:[#allocation2 + $0x1c6] sm:$0xff]
  %v1038 = vld [vmem:[#allocation2 + $0x1ce] sm:$0xff]
  %v1039 = vld [vmem:[#allocation2 + $0x1e6] sm:$0xff]
  %v1040 = vld [vmem:[#allocation2 + $0x1ee] sm:$0xff]
  %v1041 = vld [vmem:[#allocation2 + $0xa] sm:$0xff]
  %v1042 = vld [vmem:[#allocation2 + $0x12] sm:$0xff]
  %v1043 = vld [vmem:[#allocation2 + $0x2a] sm:$0xff]
  %v1044 = vld [vmem:[#allocation2 + $0x32] sm:$0xff]
  %v1045 = vld [vmem:[#allocation2 + $0x4a] sm:$0xff]
  %v1046 = vld [vmem:[#allocation2 + $0x52] sm:$0xff]
  %v1047 = vld [vmem:[#allocation2 + $0x6a] sm:$0xff]
  %v1048 = vld [vmem:[#allocation2 + $0x72] sm:$0xff]
  %v1049 = vld [vmem:[#allocation2 + $0x8a] sm:$0xff]
  %v1050 = vld [vmem:[#allocation2 + $0x92] sm:$0xff]
  %v1051 = vld [vmem:[#allocation2 + $0xaa] sm:$0xff]
  %v1052 = vld [vmem:[#allocation2 + $0xb2] sm:$0xff]
  %v1053 = vld [vmem:[#allocation2 + $0xca] sm:$0xff]
  %v1054 = vld [vmem:[#allocation2 + $0xd2] sm:$0xff]
  %v1055 = vld [vmem:[#allocation2 + $0xea] sm:$0xff]
  %v1056 = vld [vmem:[#allocation2 + $0xf2] sm:$0xff]
  %v1057 = vld [vmem:[#allocation2 + $0x10a] sm:$0xff]
  %v1058 = vld [vmem:[#allocation2 + $0x112] sm:$0xff]
  %v1059 = vld [vmem:[#allocation2 + $0x12a] sm:$0xff]
  %v1060 = vld [vmem:[#allocation2 + $0x132] sm:$0xff]
  %v1061 = vld [vmem:[#allocation2 + $0x14a] sm:$0xff]
  %v1062 = vld [vmem:[#allocation2 + $0x152] sm:$0xff]
  %v1063 = vld [vmem:[#allocation2 + $0x16a] sm:$0xff]
  %v1064 = vld [vmem:[#allocation2 + $0x172] sm:$0xff]
  %v1065 = vld [vmem:[#allocation2 + $0x18a] sm:$0xff]
  %v1066 = vld [vmem:[#allocation2 + $0x192] sm:$0xff]
  %v1067 = vld [vmem:[#allocation2 + $0x1aa] sm:$0xff]
  %v1068 = vld [vmem:[#allocation2 + $0x1b2] sm:$0xff]
  %v1069 = vld [vmem:[#allocation2 + $0x1ca] sm:$0xff]
  %v1070 = vld [vmem:[#allocation2 + $0x1d2] sm:$0xff]
  %v1071 = vld [vmem:[#allocation2 + $0x1ea] sm:$0xff]
  %v1072 = vld [vmem:[#allocation2 + $0x1f2] sm:$0xff]
  %v1073 = vadd.f32 %v1009, %v1041
  %v1074 = vadd.f32 %v1010, %v1042
  %v1075 = vadd.f32 %v1011, %v1043
  %v1076 = vadd.f32 %v1012, %v1044
  %v1077 = vadd.f32 %v1013, %v1045
  %v1078 = vadd.f32 %v1014, %v1046
  %v1079 = vadd.f32 %v1015, %v1047
  %v1080 = vadd.f32 %v1016, %v1048
  %v1081 = vadd.f32 %v1017, %v1049
  %v1082 = vadd.f32 %v1018, %v1050
  %v1083 = vadd.f32 %v1019, %v1051
  %v1084 = vadd.f32 %v1020, %v1052
  %v1085 = vadd.f32 %v1021, %v1053
  %v1086 = vadd.f32 %v1022, %v1054
  %v1087 = vadd.f32 %v1023, %v1055
  %v1088 = vadd.f32 %v1024, %v1056
  %v1089 = vadd.f32 %v1025, %v1057
  %v1090 = vadd.f32 %v1026, %v1058
  %v1091 = vadd.f32 %v1027, %v1059
  %v1092 = vadd.f32 %v1028, %v1060
  %v1093 = vadd.f32 %v1029, %v1061
  %v1094 = vadd.f32 %v1030, %v1062
  %v1095 = vadd.f32 %v1031, %v1063
  %v1096 = vadd.f32 %v1032, %v1064
  %v1097 = vadd.f32 %v1033, %v1065
  %v1098 = vadd.f32 %v1034, %v1066
  %v1099 = vadd.f32 %v1035, %v1067
  %v1100 = vadd.f32 %v1036, %v1068
  %v1101 = vadd.f32 %v1037, %v1069
  %v1102 = vadd.f32 %v1038, %v1070
  %v1103 = vadd.f32 %v1039, %v1071
  %v1104 = vadd.f32 %v1040, %v1072
  %v1105 = vmul.f32 %v1073, 0.053990968
  %v1106 = vmul.f32 %v1074, 0.053990968
  %v1107 = vmul.f32 %v1075, 0.053990968
  %v1108 = vmul.f32 %v1076, 0.053990968
  %v1109 = vmul.f32 %v1077, 0.053990968
  %v1110 = vmul.f32 %v1078, 0.053990968
  %v1111 = vmul.f32 %v1079, 0.053990968
  %v1112 = vmul.f32 %v1080, 0.053990968
  %v1113 = vmul.f32 %v1081, 0.053990968
  %v1114 = vmul.f32 %v1082, 0.053990968
  %v1115 = vmul.f32 %v1083, 0.053990968
  %v1116 = vmul.f32 %v1084, 0.053990968
  %v1117 = vmul.f32 %v1085, 0.053990968
  %v1118 = vmul.f32 %v1086, 0.053990968
  %v1119 = vmul.f32 %v1087, 0.053990968
  %v1120 = vmul.f32 %v1088, 0.053990968
  %v1121 = vmul.f32 %v1089, 0.053990968
  %v1122 = vmul.f32 %v1090, 0.053990968
  %v1123 = vmul.f32 %v1091, 0.053990968
  %v1124 = vmul.f32 %v1092, 0.053990968
  %v1125 = vmul.f32 %v1093, 0.053990968
  %v1126 = vmul.f32 %v1094, 0.053990968
  %v1127 = vmul.f32 %v1095, 0.053990968
  %v1128 = vmul.f32 %v1096, 0.053990968
  %v1129 = vmul.f32 %v1097, 0.053990968
  %v1130 = vmul.f32 %v1098, 0.053990968
  %v1131 = vmul.f32 %v1099, 0.053990968
  %v1132 = vmul.f32 %v1100, 0.053990968
  %v1133 = vmul.f32 %v1101, 0.053990968
  %v1134 = vmul.f32 %v1102, 0.053990968
  %v1135 = vmul.f32 %v1103, 0.053990968
  %v1136 = vmul.f32 %v1104, 0.053990968
  %v1137 = vadd.f32 %v977, %v1105
  %v1138 = vadd.f32 %v978, %v1106
  %v1139 = vadd.f32 %v979, %v1107
  %v1140 = vadd.f32 %v980, %v1108
  %v1141 = vadd.f32 %v981, %v1109
  %v1142 = vadd.f32 %v982, %v1110
  %v1143 = vadd.f32 %v983, %v1111
  %v1144 = vadd.f32 %v984, %v1112
  %v1145 = vadd.f32 %v985, %v1113
  %v1146 = vadd.f32 %v986, %v1114
  %v1147 = vadd.f32 %v987, %v1115
  %v1148 = vadd.f32 %v988, %v1116
  %v1149 = vadd.f32 %v989, %v1117
  %v1150 = vadd.f32 %v990, %v1118
  %v1151 = vadd.f32 %v991, %v1119
  %v1152 = vadd.f32 %v992, %v1120
  %v1153 = vadd.f32 %v993, %v1121
  %v1154 = vadd.f32 %v994, %v1122
  %v1155 = vadd.f32 %v995, %v1123
  %v1156 = vadd.f32 %v996, %v1124
  %v1157 = vadd.f32 %v997, %v1125
  %v1158 = vadd.f32 %v998, %v1126
  %v1159 = vadd.f32 %v999, %v1127
  %v1160 = vadd.f32 %v1000, %v1128
  %v1161 = vadd.f32 %v1001, %v1129
  %v1162 = vadd.f32 %v1002, %v1130
  %v1163 = vadd.f32 %v1003, %v1131
  %v1164 = vadd.f32 %v1004, %v1132
  %v1165 = vadd.f32 %v1005, %v1133
  %v1166 = vadd.f32 %v1006, %v1134
  %v1167 = vadd.f32 %v1007, %v1135
  %v1168 = vadd.f32 %v1008, %v1136
  %v1169 = vld [vmem:[#allocation2 + $0x7] sm:$0xff]
  %v1170 = vld [vmem:[#allocation2 + $0xf] sm:$0xff]
  %v1171 = vld [vmem:[#allocation2 + $0x27] sm:$0xff]
  %v1172 = vld [vmem:[#allocation2 + $0x2f] sm:$0xff]
  %v1173 = vld [vmem:[#allocation2 + $0x47] sm:$0xff]
  %v1174 = vld [vmem:[#allocation2 + $0x4f] sm:$0xff]
  %v1175 = vld [vmem:[#allocation2 + $0x67] sm:$0xff]
  %v1176 = vld [vmem:[#allocation2 + $0x6f] sm:$0xff]
  %v1177 = vld [vmem:[#allocation2 + $0x87] sm:$0xff]
  %v1178 = vld [vmem:[#allocation2 + $0x8f] sm:$0xff]
  %v1179 = vld [vmem:[#allocation2 + $0xa7] sm:$0xff]
  %v1180 = vld [vmem:[#allocation2 + $0xaf] sm:$0xff]
  %v1181 = vld [vmem:[#allocation2 + $0xc7] sm:$0xff]
  %v1182 = vld [vmem:[#allocation2 + $0xcf] sm:$0xff]
  %v1183 = vld [vmem:[#allocation2 + $0xe7] sm:$0xff]
  %v1184 = vld [vmem:[#allocation2 + $0xef] sm:$0xff]
  %v1185 = vld [vmem:[#allocation2 + $0x107] sm:$0xff]
  %v1186 = vld [vmem:[#allocation2 + $0x10f] sm:$0xff]
  %v1187 = vld [vmem:[#allocation2 + $0x127] sm:$0xff]
  %v1188 = vld [vmem:[#allocation2 + $0x12f] sm:$0xff]
  %v1189 = vld [vmem:[#allocation2 + $0x147] sm:$0xff]
  %v1190 = vld [vmem:[#allocation2 + $0x14f] sm:$0xff]
  %v1191 = vld [vmem:[#allocation2 + $0x167] sm:$0xff]
  %v1192 = vld [vmem:[#allocation2 + $0x16f] sm:$0xff]
  %v1193 = vld [vmem:[#allocation2 + $0x187] sm:$0xff]
  %v1194 = vld [vmem:[#allocation2 + $0x18f] sm:$0xff]
  %v1195 = vld [vmem:[#allocation2 + $0x1a7] sm:$0xff]
  %v1196 = vld [vmem:[#allocation2 + $0x1af] sm:$0xff]
  %v1197 = vld [vmem:[#allocation2 + $0x1c7] sm:$0xff]
  %v1198 = vld [vmem:[#allocation2 + $0x1cf] sm:$0xff]
  %v1199 = vld [vmem:[#allocation2 + $0x1e7] sm:$0xff]
  %v1200 = vld [vmem:[#allocation2 + $0x1ef] sm:$0xff]
  %v1201 = vld [vmem:[#allocation2 + $0x9] sm:$0xff]
  %v1202 = vld [vmem:[#allocation2 + $0x11] sm:$0xff]
  %v1203 = vld [vmem:[#allocation2 + $0x29] sm:$0xff]
  %v1204 = vld [vmem:[#allocation2 + $0x31] sm:$0xff]
  %v1205 = vld [vmem:[#allocation2 + $0x49] sm:$0xff]
  %v1206 = vld [vmem:[#allocation2 + $0x51] sm:$0xff]
  %v1207 = vld [vmem:[#allocation2 + $0x69] sm:$0xff]
  %v1208 = vld [vmem:[#allocation2 + $0x71] sm:$0xff]
  %v1209 = vld [vmem:[#allocation2 + $0x89] sm:$0xff]
  %v1210 = vld [vmem:[#allocation2 + $0x91] sm:$0xff]
  %v1211 = vld [vmem:[#allocation2 + $0xa9] sm:$0xff]
  %v1212 = vld [vmem:[#allocation2 + $0xb1] sm:$0xff]
  %v1213 = vld [vmem:[#allocation2 + $0xc9] sm:$0xff]
  %v1214 = vld [vmem:[#allocation2 + $0xd1] sm:$0xff]
  %v1215 = vld [vmem:[#allocation2 + $0xe9] sm:$0xff]
  %v1216 = vld [vmem:[#allocation2 + $0xf1] sm:$0xff]
  %v1217 = vld [vmem:[#allocation2 + $0x109] sm:$0xff]
  %v1218 = vld [vmem:[#allocation2 + $0x111] sm:$0xff]
  %v1219 = vld [vmem:[#allocation2 + $0x129] sm:$0xff]
  %v1220 = vld [vmem:[#allocation2 + $0x131] sm:$0xff]
  %v1221 = vld [vmem:[#allocation2 + $0x149] sm:$0xff]
  %v1222 = vld [vmem:[#allocation2 + $0x151] sm:$0xff]
  %v1223 = vld [vmem:[#allocation2 + $0x169] sm:$0xff]
  %v1224 = vld [vmem:[#allocation2 + $0x171] sm:$0xff]
  %v1225 = vld [vmem:[#allocation2 + $0x189] sm:$0xff]
  %v1226 = vld [vmem:[#allocation2 + $0x191] sm:$0xff]
  %v1227 = vld [vmem:[#allocation2 + $0x1a9] sm:$0xff]
  %v1228 = vld [vmem:[#allocation2 + $0x1b1] sm:$0xff]
  %v1229 = vld [vmem:[#allocation2 + $0x1c9] sm:$0xff]
  %v1230 = vld [vmem:[#allocation2 + $0x1d1] sm:$0xff]
  %v1231 = vld [vmem:[#allocation2 + $0x1e9] sm:$0xff]
  %v1232 = vld [vmem:[#allocation2 + $0x1f1] sm:$0xff]
  %v1233 = vadd.f32 %v1169, %v1201
  %v1234 = vadd.f32 %v1170, %v1202
  %v1235 = vadd.f32 %v1171, %v1203
  %v1236 = vadd.f32 %v1172, %v1204
  %v1237 = vadd.f32 %v1173, %v1205
  %v1238 = vadd.f32 %v1174, %v1206
  %v1239 = vadd.f32 %v1175, %v1207
  %v1240 = vadd.f32 %v1176, %v1208
  %v1241 = vadd.f32 %v1177, %v1209
  %v1242 = vadd.f32 %v1178, %v1210
  %v1243 = vadd.f32 %v1179, %v1211
  %v1244 = vadd.f32 %v1180, %v1212
  %v1245 = vadd.f32 %v1181, %v1213
  %v1246 = vadd.f32 %v1182, %v1214
  %v1247 = vadd.f32 %v1183, %v1215
  %v1248 = vadd.f32 %v1184, %v1216
  %v1249 = vadd.f32 %v1185, %v1217
  %v1250 = vadd.f32 %v1186, %v1218
  %v1251 = vadd.f32 %v1187, %v1219
  %v1252 = vadd.f32 %v1188, %v1220
  %v1253 = vadd.f32 %v1189, %v1221
  %v1254 = vadd.f32 %v1190, %v1222
  %v1255 = vadd.f32 %v1191, %v1223
  %v1256 = vadd.f32 %v1192, %v1224
  %v1257 = vadd.f32 %v1193, %v1225
  %v1258 = vadd.f32 %v1194, %v1226
  %v1259 = vadd.f32 %v1195, %v1227
  %v1260 = vadd.f32 %v1196, %v1228
  %v1261 = vadd.f32 %v1197, %v1229
  %v1262 = vadd.f32 %v1198, %v1230
  %v1263 = vadd.f32 %v1199, %v1231
  %v1264 = vadd.f32 %v1200, %v1232
  %v1265 = vmul.f32 %v1233, 0.24197073
  %v1266 = vmul.f32 %v1234, 0.24197073
  %v1267 = vmul.f32 %v1235, 0.24197073
  %v1268 = vmul.f32 %v1236, 0.24197073
  %v1269 = vmul.f32 %v1237, 0.24197073
  %v1270 = vmul.f32 %v1238, 0.24197073
  %v1271 = vmul.f32 %v1239, 0.24197073
  %v1272 = vmul.f32 %v1240, 0.24197073
  %v1273 = vmul.f32 %v1241, 0.24197073
  %v1274 = vmul.f32 %v1242, 0.24197073
  %v1275 = vmul.f32 %v1243, 0.24197073
  %v1276 = vmul.f32 %v1244, 0.24197073
  %v1277 = vmul.f32 %v1245, 0.24197073
  %v1278 = vmul.f32 %v1246, 0.24197073
  %v1279 = vmul.f32 %v1247, 0.24197073
  %v1280 = vmul.f32 %v1248, 0.24197073
  %v1281 = vmul.f32 %v1249, 0.24197073
  %v1282 = vmul.f32 %v1250, 0.24197073
  %v1283 = vmul.f32 %v1251, 0.24197073
  %v1284 = vmul.f32 %v1252, 0.24197073
  %v1285 = vmul.f32 %v1253, 0.24197073
  %v1286 = vmul.f32 %v1254, 0.24197073
  %v1287 = vmul.f32 %v1255, 0.24197073
  %v1288 = vmul.f32 %v1256, 0.24197073
  %v1289 = vmul.f32 %v1257, 0.24197073
  %v1290 = vmul.f32 %v1258, 0.24197073
  %v1291 = vmul.f32 %v1259, 0.24197073
  %v1292 = vmul.f32 %v1260, 0.24197073
  %v1293 = vmul.f32 %v1261, 0.24197073
  %v1294 = vmul.f32 %v1262, 0.24197073
  %v1295 = vmul.f32 %v1263, 0.24197073
  %v1296 = vmul.f32 %v1264, 0.24197073
  %v1297 = vadd.f32 %v865, %v1265
  %v1298 = vadd.f32 %v866, %v1266
  %v1299 = vadd.f32 %v867, %v1267
  %v1300 = vadd.f32 %v868, %v1268
  %v1301 = vadd.f32 %v869, %v1269
  %v1302 = vadd.f32 %v870, %v1270
  %v1303 = vadd.f32 %v871, %v1271
  %v1304 = vadd.f32 %v872, %v1272
  %v1305 = vadd.f32 %v873, %v1273
  %v1306 = vadd.f32 %v874, %v1274
  %v1307 = vadd.f32 %v875, %v1275
  %v1308 = vadd.f32 %v876, %v1276
  %v1309 = vadd.f32 %v877, %v1277
  %v1310 = vadd.f32 %v878, %v1278
  %v1311 = vadd.f32 %v879, %v1279
  %v1312 = vadd.f32 %v880, %v1280
  %v1313 = vadd.f32 %v881, %v1281
  %v1314 = vadd.f32 %v882, %v1282
  %v1315 = vadd.f32 %v883, %v1283
  %v1316 = vadd.f32 %v884, %v1284
  %v1317 = vadd.f32 %v885, %v1285
  %v1318 = vadd.f32 %v886, %v1286
  %v1319 = vadd.f32 %v887, %v1287
  %v1320 = vadd.f32 %v888, %v1288
  %v1321 = vadd.f32 %v889, %v1289
  %v1322 = vadd.f32 %v890, %v1290
  %v1323 = vadd.f32 %v891, %v1291
  %v1324 = vadd.f32 %v892, %v1292
  %v1325 = vadd.f32 %v893, %v1293
  %v1326 = vadd.f32 %v894, %v1294
  %v1327 = vadd.f32 %v895, %v1295
  %v1328 = vadd.f32 %v896, %v1296
  %v1329 = vadd.f32 %v1297, %v1137
  %v1330 = vadd.f32 %v1298, %v1138
  %v1331 = vadd.f32 %v1299, %v1139
  %v1332 = vadd.f32 %v1300, %v1140
  %v1333 = vadd.f32 %v1301, %v1141
  %v1334 = vadd.f32 %v1302, %v1142
  %v1335 = vadd.f32 %v1303, %v1143
  %v1336 = vadd.f32 %v1304, %v1144
  %v1337 = vadd.f32 %v1305, %v1145
  %v1338 = vadd.f32 %v1306, %v1146
  %v1339 = vadd.f32 %v1307, %v1147
  %v1340 = vadd.f32 %v1308, %v1148
  %v1341 = vadd.f32 %v1309, %v1149
  %v1342 = vadd.f32 %v1310, %v1150
  %v1343 = vadd.f32 %v1311, %v1151
  %v1344 = vadd.f32 %v1312, %v1152
  %v1345 = vadd.f32 %v1313, %v1153
  %v1346 = vadd.f32 %v1314, %v1154
  %v1347 = vadd.f32 %v1315, %v1155
  %v1348 = vadd.f32 %v1316, %v1156
  %v1349 = vadd.f32 %v1317, %v1157
  %v1350 = vadd.f32 %v1318, %v1158
  %v1351 = vadd.f32 %v1319, %v1159
  %v1352 = vadd.f32 %v1320, %v1160
  %v1353 = vadd.f32 %v1321, %v1161
  %v1354 = vadd.f32 %v1322, %v1162
  %v1355 = vadd.f32 %v1323, %v1163
  %v1356 = vadd.f32 %v1324, %v1164
  %v1357 = vadd.f32 %v1325, %v1165
  %v1358 = vadd.f32 %v1326, %v1166
  %v1359 = vadd.f32 %v1327, %v1167
  %v1360 = vadd.f32 %v1328, %v1168
  %v1361 = vadd.f32 %v1329, %v609
  %v1362 = vadd.f32 %v1330, %v610
  %v1363 = vadd.f32 %v1331, %v611
  %v1364 = vadd.f32 %v1332, %v612
  %v1365 = vadd.f32 %v1333, %v613
  %v1366 = vadd.f32 %v1334, %v614
  %v1367 = vadd.f32 %v1335, %v615
  %v1368 = vadd.f32 %v1336, %v616
  %v1369 = vadd.f32 %v1337, %v617
  %v1370 = vadd.f32 %v1338, %v618
  %v1371 = vadd.f32 %v1339, %v619
  %v1372 = vadd.f32 %v1340, %v620
  %v1373 = vadd.f32 %v1341, %v621
  %v1374 = vadd.f32 %v1342, %v622
  %v1375 = vadd.f32 %v1343, %v623
  %v1376 = vadd.f32 %v1344, %v624
  %v1377 = vadd.f32 %v1345, %v625
  %v1378 = vadd.f32 %v1346, %v626
  %v1379 = vadd.f32 %v1347, %v627
  %v1380 = vadd.f32 %v1348, %v628
  %v1381 = vadd.f32 %v1349, %v629
  %v1382 = vadd.f32 %v1350, %v630
  %v1383 = vadd.f32 %v1351, %v631
  %v1384 = vadd.f32 %v1352, %v632
  %v1385 = vadd.f32 %v1353, %v633
  %v1386 = vadd.f32 %v1354, %v634
  %v1387 = vadd.f32 %v1355, %v635
  %v1388 = vadd.f32 %v1356, %v636
  %v1389 = vadd.f32 %v1357, %v637
  %v1390 = vadd.f32 %v1358, %v638
  %v1391 = vadd.f32 %v1359, %v639
  %v1392 = vadd.f32 %v1360, %v640
  %1393 = vst.msk [vmem:[%s1] sm:$0xff] %vm512, %v1361
  %1394 = vst.msk [vmem:[%s1 + $0x8] sm:$0xff] %vm512, %v1362
  %1395 = vst.msk [vmem:[%s1 + $0x10] sm:$0xff] %vm512, %v1363
  %1396 = vst.msk [vmem:[%s1 + $0x18] sm:$0xff] %vm512, %v1364
  %1397 = vst.msk [vmem:[%s1 + $0x20] sm:$0xff] %vm512, %v1365
  %1398 = vst.msk [vmem:[%s1 + $0x28] sm:$0xff] %vm512, %v1366
  %1399 = vst.msk [vmem:[%s1 + $0x30] sm:$0xff] %vm512, %v1367
  %1400 = vst.msk [vmem:[%s1 + $0x38] sm:$0xff] %vm512, %v1368
  %1401 = vst.msk [vmem:[%s1 + $0x40] sm:$0xff] %vm512, %v1369
  %1402 = vst.msk [vmem:[%s1 + $0x48] sm:$0xff] %vm512, %v1370
  %1403 = vst.msk [vmem:[%s1 + $0x50] sm:$0xff] %vm512, %v1371
  %1404 = vst.msk [vmem:[%s1 + $0x58] sm:$0xff] %vm512, %v1372
  %1405 = vst.msk [vmem:[%s1 + $0x60] sm:$0xff] %vm512, %v1373
  %1406 = vst.msk [vmem:[%s1 + $0x68] sm:$0xff] %vm512, %v1374
  %1407 = vst.msk [vmem:[%s1 + $0x70] sm:$0xff] %vm512, %v1375
  %1408 = vst.msk [vmem:[%s1 + $0x78] sm:$0xff] %vm512, %v1376
  %1409 = vst.msk [vmem:[%s1 + $0x80] sm:$0xff] %vm512, %v1377
  %1410 = vst.msk [vmem:[%s1 + $0x88] sm:$0xff] %vm512, %v1378
  %1411 = vst.msk [vmem:[%s1 + $0x90] sm:$0xff] %vm512, %v1379
  %1412 = vst.msk [vmem:[%s1 + $0x98] sm:$0xff] %vm512, %v1380
  %1413 = vst.msk [vmem:[%s1 + $0xa0] sm:$0xff] %vm512, %v1381
  %1414 = vst.msk [vmem:[%s1 + $0xa8] sm:$0xff] %vm512, %v1382
  %1415 = vst.msk [vmem:[%s1 + $0xb0] sm:$0xff] %vm512, %v1383
  %1416 = vst.msk [vmem:[%s1 + $0xb8] sm:$0xff] %vm512, %v1384
  %1417 = vst.msk [vmem:[%s1 + $0xc0] sm:$0xff] %vm512, %v1385
  %1418 = vst.msk [vmem:[%s1 + $0xc8] sm:$0xff] %vm512, %v1386
  %1419 = vst.msk [vmem:[%s1 + $0xd0] sm:$0xff] %vm512, %v1387
  %1420 = vst.msk [vmem:[%s1 + $0xd8] sm:$0xff] %vm512, %v1388
  %1421 = vst.msk [vmem:[%s1 + $0xe0] sm:$0xff] %vm512, %v1389
  %1422 = vst.msk [vmem:[%s1 + $0xe8] sm:$0xff] %vm512, %v1390
  %1423 = vst.msk [vmem:[%s1 + $0xf0] sm:$0xff] %vm512, %v1391
  %1424 = vst.msk [vmem:[%s1 + $0xf8] sm:$0xff] %vm512, %v1392
  // Predicated region
  $region6: #{gauss_filter.1} parent=0 // pred_check
    _
  $region7: #{gauss_filter.1} parent=0 // pred_check_branch
    %1426 = sbr.rel (0) target = $region9
  $region8: #{gauss_filter.1} parent=0 // pred_region
    _
  $region9: #{gauss_filter.1} parent=0 // pred_fallthru
    _
  // Predicated region
  $region10: #{gauss_filter.1} parent=0 // pred_check
    _
  $region11: #{gauss_filter.1} parent=0 // pred_check_branch
    %1428 = sbr.rel (0) target = $region13
  $region12: #{gauss_filter.1} parent=0 // pred_region
    _
  $region13: #{gauss_filter.1} parent=0 // pred_fallthru
    _

</llo_original>
